<compile_context>
chip_gen: v6e
topology: v6e:2x2x1
jax: 0.10.0
libtpu: 0.0.40
codegen_flags: <defaults>
</compile_context>

<pallas_src>
import functools

import numpy as np
import jax
import jax.numpy as jnp
from jax import lax
from jax.experimental import pallas as pl
from jax.experimental.pallas import tpu as pltpu

_F32 = jnp.float32


# ---------------------------------------------------------------------------
# Generation-aware sizing helpers
# ---------------------------------------------------------------------------
def _vmem_limit_bytes():
    """~3/4 of physical VMEM, capped at 100 MiB.
    v5e/v6e (128 MiB) -> 96 MiB, v7x (64 MiB) -> 48 MiB, unknown -> 48 MiB."""
    try:
        cap = int(pltpu.get_tpu_info().vmem_capacity_bytes)
        if cap <= 0:
            raise ValueError("bad vmem capacity")
    except Exception:
        cap = 64 * 1024 * 1024                    # conservative (v7x-sized) fallback
    return max(min(cap * 3 // 4, 100 * 1024 * 1024), 16 * 1024 * 1024)


def _pick_hw_tile(hw, stream_bytes_per_lane, vmem_limit):
    """Largest pixel (lane) tile whose double-buffered streamed operands fit in
    ~half the VMEM limit.  Full H*W per batch element when it fits (always a
    layout-legal 'full extent' block); otherwise a multiple of 128, <=64K."""
    budget = vmem_limit // 2                      # headroom for compiler scratch
    cap = budget // max(stream_bytes_per_lane, 1)
    cap = max(128, (cap // 128) * 128)
    cap = min(cap, 64 * 1024)                     # diminishing returns past 64K lanes
    if hw <= cap:
        return hw                                 # single full-extent tile
    return cap


# ---------------------------------------------------------------------------
# Shared in-kernel pieces
# ---------------------------------------------------------------------------
def _ae_mlp(x, w1, b1, w2, b2):
    """model_AE substitute: per-pixel MLP (1x1 conv -> tanh -> 1x1 conv).
    precision=HIGHEST -> exact-f32 MXU path (K = C is tiny, cost is noise)."""
    h = jnp.tanh(
        jnp.dot(w1, x, preferred_element_type=_F32,
                precision=lax.Precision.HIGHEST) + b1)
    return (jnp.dot(w2, h, preferred_element_type=_F32,
                    precision=lax.Precision.HIGHEST) + b2)


def _select_channels(a, step):
    """index = arange(0, C, Ncov+1) gather, done in-kernel with static sublane
    slices (no XLA gathers / extra HBM round trips in the wrapper)."""
    if step <= 1:
        return a
    rows = [a[i:i + 1, :] for i in range(0, a.shape[0], step)]
    return rows[0] if len(rows) == 1 else jnp.concatenate(rows, axis=0)


# ---------------------------------------------------------------------------
# Kernel 1: global gradient norm  sqrt(mean(G(x0)^2))
# ---------------------------------------------------------------------------
def _norm_kernel(x_ref, xobs_ref, mask_ref, w1_ref, b1_ref, w2_ref, b2_ref,
                 ng_ref, sumsq_sc, *, ch_step, inv_n, hw, hw_tile, need_mask):
    b = pl.program_id(0)
    t = pl.program_id(1)

    @pl.when(jnp.logical_and(b == 0, t == 0))
    def _init():
        sumsq_sc[0] = 0.0

    xf = x_ref[...].astype(_F32)      # bf16 callers: cast in VMEM, not in HBM
    of = xobs_ref[...].astype(_F32)
    mf = mask_ref[...].astype(_F32)
    xt = _select_channels(xf, ch_step)
    ot = _select_channels(of, ch_step)
    mt = _select_channels(mf, ch_step)

    xpred = _ae_mlp(xf, w1_ref[...], b1_ref[...], w2_ref[...], b2_ref[...])
    # compute_Grad (GradType==0): G(x) = (xpred - x) + mask*(x - xobs)
    g0 = (xpred - xt) + mt * (xt - ot)
    sq = g0 * g0
    if need_mask:
        # cdiv tail block: ignore out-of-bounds lanes (undefined padded data);
        # jnp.where (not mul-by-0) so NaN/Inf garbage cannot leak in.
        col = t * hw_tile + lax.broadcasted_iota(jnp.int32, sq.shape, 1)
        sq = jnp.where(col < hw, sq, 0.0)
    # Per-tile sums are tree-reduced; only the (few) tile partials are added
    # sequentially into this f32 scalar, so precision loss is negligible.
    sumsq_sc[0] += jnp.sum(sq)

    @pl.when(jnp.logical_and(b == pl.num_programs(0) - 1,
                             t == pl.num_programs(1) - 1))
    def _finalize():
        ng_ref[0] = jnp.sqrt(sumsq_sc[0] * inv_n)


# ---------------------------------------------------------------------------
# Kernel 2: NGrad fixed-point updates (fully block-parallel)
# ---------------------------------------------------------------------------
def _update_kernel(x_ref, xobs_ref, mask_ref, w1_ref, b1_ref, w2_ref, b2_ref,
                   delta_ref, ng_ref, xout_ref, *, ch_step, n_grad):
    xf = x_ref[...].astype(_F32)
    of = xobs_ref[...].astype(_F32)
    mf = mask_ref[...].astype(_F32)
    xt = _select_channels(xf, ch_step)
    ot = _select_channels(of, ch_step)
    mt = _select_channels(mf, ch_step)

    xpred = _ae_mlp(xf, w1_ref[...], b1_ref[...], w2_ref[...], b2_ref[...])
    # G(x) = (xpred - x) + mask*(x - xobs) = c1 + c2*x   (loop-invariant c1, c2)
    c1 = xpred - mt * ot
    c2 = mt - 1.0
    # model_GradUpdate0: grad = delta * G(x) / normgrad
    s = delta_ref[0] / ng_ref[0]

    def step(xv):
        return xv - s * (c1 + c2 * xv)            # 2 FMAs / element / iteration

    x = xt
    if n_grad <= 16:                              # NGrad is a small static int
        for _ in range(n_grad):
            x = step(x)
    else:                                         # bound vreg pressure otherwise
        x = lax.fori_loop(0, n_grad, lambda _, xv: step(xv), x, unroll=4)

    xout_ref[...] = x.astype(xout_ref.dtype)


# ---------------------------------------------------------------------------
# pallas_call wrappers
# ---------------------------------------------------------------------------
def _tile_spec(rows, hw_tile):
    return pl.BlockSpec((pl.Squeezed(), rows, hw_tile), lambda b, t: (b, 0, t))


def _resident_spec(arr):
    nd = arr.ndim
    return pl.BlockSpec(arr.shape, lambda *_: (0,) * nd)


_SMEM_SPEC = pl.BlockSpec(memory_space=pltpu.MemorySpace.SMEM)


def _compute_normgrad(params, x3, obs3, mask3, *, ch_step, hw_tile, n_tiles,
                      need_mask, vmem_limit):
    w1, b1, w2, b2 = params
    B, c_tot, HW = x3.shape
    cs = w2.shape[0]
    inv_n = 1.0 / float(B * cs * HW)
    kern = functools.partial(_norm_kernel, ch_step=ch_step, inv_n=inv_n,
                             hw=HW, hw_tile=hw_tile, need_mask=need_mask)
    return pl.pallas_call(
        kern,
        grid=(B, n_tiles),
        in_specs=[_tile_spec(c_tot, hw_tile)] * 3
                 + [_resident_spec(w1), _resident_spec(b1),
                    _resident_spec(w2), _resident_spec(b2)],
        out_specs=_SMEM_SPEC,
        out_shape=jax.ShapeDtypeStruct((1,), _F32),
        scratch_shapes=[pltpu.SMEM((1,), _F32)],
        compiler_params=pltpu.CompilerParams(
            # Cross-tile scalar accumulation -> this (lighter) pass stays serial.
            dimension_semantics=("arbitrary", "arbitrary"),
            vmem_limit_bytes=vmem_limit,
        ),
    )(x3, obs3, mask3, w1, b1, w2, b2)


def _run_update(params, delta_arr, ng_arr, x3, obs3, mask3, out_dtype, *,
                ch_step, hw_tile, n_tiles, n_grad, vmem_limit):
    w1, b1, w2, b2 = params
    B, c_tot, HW = x3.shape
    cs = w2.shape[0]
    kern = functools.partial(_update_kernel, ch_step=ch_step, n_grad=n_grad)
    return pl.pallas_call(
        kern,
        grid=(B, n_tiles),
        in_specs=[_tile_spec(c_tot, hw_tile)] * 3
                 + [_resident_spec(w1), _resident_spec(b1),
                    _resident_spec(w2), _resident_spec(b2),
                    _SMEM_SPEC, _SMEM_SPEC],
        out_specs=_tile_spec(cs, hw_tile),
        out_shape=jax.ShapeDtypeStruct((B, cs, HW), out_dtype),
        compiler_params=pltpu.CompilerParams(
            # Every output block is independent -> megacore-parallel on v7x.
            dimension_semantics=("parallel", "parallel"),
            vmem_limit_bytes=vmem_limit,
        ),
    )(x3, obs3, mask3, w1, b1, w2, b2, delta_arr, ng_arr)


# ---------------------------------------------------------------------------
# Wrapper mirroring Model_4DVarNN_Grad.forward
# ---------------------------------------------------------------------------
class Model4DVarNNGradPallas:
    """JAX/Pallas port of Model_4DVarNN_Grad.

    Ported configuration: OptimType=0 (model_GradUpdate0: grad = delta*G(x)/normgrad),
    GradType=0 (subgradient), InterpFlag=False.  model_AE is a synthetic,
    deterministically-initialized 2-layer pointwise-conv autoencoder.
    """

    def __init__(self, shape_data, niter_grad, grad_type=0, optim_type=0,
                 interp_flag=False, periodic_bnd=False, n_cov=0, hidden=32,
                 key=None):
        assert optim_type == 0 and grad_type == 0, "only OptimType=0 / GradType=0 ported"
        # TODO(synk): OptimType 1-4 (conv/LSTM GradUpdate modules) and GradType==1
        #             (torch.autograd.grad gradient) have no definition in the
        #             source module and are not ported.
        self.shape = tuple(shape_data)            # (C, H, W)
        self.NGrad = int(niter_grad)
        self.Ncov = int(n_cov)
        self.InterpFlag = interp_flag
        self.periodicBnd = periodic_bnd

        c_total = self.shape[0]
        index = np.arange(0, c_total, self.Ncov + 1)
        c_sel = int(len(index))
        if key is None:
            key = jax.random.PRNGKey(0)
        k1, k2 = jax.random.split(key)
        # deterministic synthetic AE parameters (1x1 conv -> tanh -> 1x1 conv)
        self.w1 = (0.1 * jax.random.normal(k1, (hidden, c_total))).astype(_F32)
        self.b1 = jnp.zeros((hidden, 1), _F32)
        self.w2 = (0.1 * jax.random.normal(k2, (c_sel, hidden))).astype(_F32)
        self.b2 = jnp.zeros((c_sel, 1), _F32)
        # model_GradUpdate0.delta initialized to 1.0 (learnable scalar)
        self.delta = jnp.ones((1,), _F32)

    def __call__(self, x_inp, xobs, mask, g1=None, g2=None, normgrad=0.0):
        if self.InterpFlag:
            # TODO(synk): InterpFlag=True masked blend (x*mask + (x-grad)*(1-mask))
            #             not wired into the kernels (reference also reads mask_
            #             which only exists on this path).
            raise NotImplementedError("InterpFlag=True path not ported")

        B, C, H, W = x_inp.shape
        assert C == self.shape[0]
        HW = H * W
        step = self.Ncov + 1
        cs = self.w2.shape[0]
        out_dtype = x_inp.dtype

        # torch's index_fill + index_add exactly restores the gathered channels
        # (a mathematical no-op) -> skipped.  Channel selection + dtype casts
        # happen inside the kernels; the wrapper only takes free reshaped views.
        x3 = x_inp.reshape(B, C, HW)
        obs3 = xobs.reshape(B, C, HW)
        mask3 = mask.reshape(B, C, HW)

        # VMEM-budgeted, generation-aware lane tiling.
        vmem_limit = _vmem_limit_bytes()
        bytes_per_lane = 2 * (                    # 2x: double-buffered streams
            C * (jnp.dtype(x3.dtype).itemsize
                 + jnp.dtype(obs3.dtype).itemsize
                 + jnp.dtype(mask3.dtype).itemsize)
            + cs * jnp.dtype(out_dtype).itemsize)
        hw_tile = _pick_hw_tile(HW, bytes_per_lane, vmem_limit)
        n_tiles = -(-HW // hw_tile)
        need_mask = (n_tiles * hw_tile != HW)

        params = (self.w1, self.b1, self.w2, self.b2)

        # _normgrad handling: a nonzero Python-scalar normgrad statically skips
        # the norm kernel (halves HBM reads); a traced normgrad keeps the
        # reference's runtime `== 0.0` semantics via jnp.where.
        static_scalar = isinstance(normgrad, (int, float, np.integer, np.floating))
        if static_scalar and float(normgrad) != 0.0:
            ng_arr = jnp.full((1,), float(normgrad), _F32)
        else:
            ng_arr = _compute_normgrad(params, x3, obs3, mask3, ch_step=step,
                                       hw_tile=hw_tile, n_tiles=n_tiles,
                                       need_mask=need_mask, vmem_limit=vmem_limit)
            if not static_scalar:
                user = jnp.asarray(normgrad, _F32).reshape(1)
                ng_arr = jnp.where(user == 0.0, ng_arr, user)

        x_out = _run_update(params, self.delta, ng_arr, x3, obs3, mask3,
                            out_dtype, ch_step=step, hw_tile=hw_tile,
                            n_tiles=n_tiles, n_grad=self.NGrad,
                            vmem_limit=vmem_limit)

        # OptimType == 0 return signature: (target_x, _normgrad)
        return x_out.reshape(B, cs, H, W), ng_arr[0]


# ---------------------------------------------------------------------------
# Pure-JAX reference (N_cov == 0) for correctness checks.
# ---------------------------------------------------------------------------
def _pure_jax_reference(model, x, xobs, mask, normgrad=0.0):
    B, C, H, W = x.shape
    x2 = jnp.transpose(x, (1, 0, 2, 3)).reshape(C, -1).astype(_F32)
    h = jnp.tanh(jnp.dot(model.w1, x2, precision=lax.Precision.HIGHEST) + model.b1)
    xp2 = jnp.dot(model.w2, h, precision=lax.Precision.HIGHEST) + model.b2
    xpred = jnp.transpose(xp2.reshape(xp2.shape[0], B, H, W), (1, 0, 2, 3))
    g0 = (xpred - x) + mask * (x - xobs)
    ng = jnp.sqrt(jnp.mean(g0 ** 2)) if normgrad == 0.0 else jnp.float32(normgrad)
    tx = x
    for _ in range(model.NGrad):
        tx = tx - model.delta[0] * ((xpred - tx) + mask * (tx - xobs)) / ng
    return tx, ng


if __name__ == "__main__":
    key = jax.random.PRNGKey(0)
    B, C, H, W = 2, 4, 16, 16
    kx, ko, km, kp = jax.random.split(key, 4)
    x_inp = jax.random.normal(kx, (B, C, H, W), dtype=jnp.float32)
    xobs = jax.random.normal(ko, (B, C, H, W), dtype=jnp.float32)
    mask = (jax.random.uniform(km, (B, C, H, W)) > 0.5).astype(jnp.float32)

    model = Model4DVarNNGradPallas((C, H, W), niter_grad=5, key=kp)

    # --- normgrad == 0.0 path: norm kernel + parallel update kernel ---------
    x_out, normgrad_out = model(x_inp, xobs, mask)
    jax.block_until_ready((x_out, normgrad_out))

    assert x_out.shape == (B, C, H, W)
    assert normgrad_out.shape == ()
    assert bool(jnp.all(jnp.isfinite(x_out)))
    assert bool(jnp.isfinite(normgrad_out))

    ref_x, ref_ng = _pure_jax_reference(model, x_inp, xobs, mask)
    # Exact-f32 matmuls (precision=HIGHEST) in both kernel and reference ->
    # tight tolerance even after the (1+delta/normgrad)^NGrad amplification.
    np.testing.assert_allclose(np.asarray(x_out), np.asarray(ref_x),
                               rtol=2e-3, atol=2e-3)
    np.testing.assert_allclose(float(normgrad_out), float(ref_ng),
                               rtol=1e-4, atol=1e-6)

    # --- nonzero static normgrad path: norm kernel statically skipped -------
    x_out2, normgrad_out2 = model(x_inp, xobs, mask, normgrad=2.5)
    jax.block_until_ready((x_out2, normgrad_out2))
    ref_x2, _ = _pure_jax_reference(model, x_inp, xobs, mask, normgrad=2.5)
    np.testing.assert_allclose(np.asarray(x_out2), np.asarray(ref_x2),
                               rtol=2e-3, atol=2e-3)
    np.testing.assert_allclose(float(normgrad_out2), 2.5, rtol=0, atol=0)

    print("KERNEL_OK")
</pallas_src>

<mosaic_0001>
module attributes {stable_mosaic.version = 11 : i64} {
  func.func @_norm_kernel(%arg0: i32, %arg1: i32, %arg2: memref<1x4x256xf32, #tpu.memory_space<vmem>>, %arg3: memref<1x4x256xf32, #tpu.memory_space<vmem>>, %arg4: memref<1x4x256xf32, #tpu.memory_space<vmem>>, %arg5: memref<32x4xf32, #tpu.memory_space<vmem>>, %arg6: memref<32x1xf32, #tpu.memory_space<vmem>>, %arg7: memref<4x32xf32, #tpu.memory_space<vmem>>, %arg8: memref<4x1xf32, #tpu.memory_space<vmem>>, %arg9: memref<1xf32, #tpu.memory_space<smem>>, %arg10: memref<1xf32, #tpu.memory_space<smem>>) attributes {dimension_semantics = [#tpu.dimension_semantics<arbitrary>, #tpu.dimension_semantics<arbitrary>], iteration_bounds = array<i64: 2, 1>, scalar_prefetch = 0 : i64, scratch_operands = 1 : i64, tpu.core_type = #tpu.core_type<tc>, window_params = [{transform_indices = @transform_0, window_bounds = array<i64: 1, 4, 256>}, {transform_indices = @transform_1, window_bounds = array<i64: 1, 4, 256>}, {transform_indices = @transform_2, window_bounds = array<i64: 1, 4, 256>}, {pipeline_mode = #tpu.pipeline_mode<synchronous>, transform_indices = @transform_3, window_bounds = array<i64: 32, 4>}, {pipeline_mode = #tpu.pipeline_mode<synchronous>, transform_indices = @transform_4, window_bounds = array<i64: 32, 1>}, {pipeline_mode = #tpu.pipeline_mode<synchronous>, transform_indices = @transform_5, window_bounds = array<i64: 4, 32>}, {pipeline_mode = #tpu.pipeline_mode<synchronous>, transform_indices = @transform_6, window_bounds = array<i64: 4, 1>}, {transform_indices = @transform_7, window_bounds = array<i64: 1>}]} {
    %c0_i32 = arith.constant 0 : i32
    %0 = arith.cmpi eq, %arg0, %c0_i32 : i32
    %c0_i32_0 = arith.constant 0 : i32
    %1 = arith.cmpi eq, %arg1, %c0_i32_0 : i32
    %2 = arith.andi %0, %1 : i1
    %3 = arith.extui %2 : i1 to i32
    %c0_i32_1 = arith.constant 0 : i32
    %4 = arith.cmpi ne, %3, %c0_i32_1 : i32
    scf.if %4 {
      %cst_24 = arith.constant 0.000000e+00 : f32
      %c0_25 = arith.constant 0 : index
      %39 = memref.load %arg10[%c0_25] : memref<1xf32, #tpu.memory_space<smem>>
      memref.store %cst_24, %arg10[%c0_25] : memref<1xf32, #tpu.memory_space<smem>>
    } else {
    }
    %c0 = arith.constant 0 : index
    %c0_2 = arith.constant 0 : index
    %c0_3 = arith.constant 0 : index
    %5 = vector.load %arg2[%c0, %c0_2, %c0_3] : memref<1x4x256xf32, #tpu.memory_space<vmem>>, vector<1x4x256xf32>
    %6 = vector.shape_cast %5 : vector<1x4x256xf32> to vector<4x256xf32>
    %c0_4 = arith.constant 0 : index
    %c0_5 = arith.constant 0 : index
    %c0_6 = arith.constant 0 : index
    %7 = vector.load %arg3[%c0_4, %c0_5, %c0_6] : memref<1x4x256xf32, #tpu.memory_space<vmem>>, vector<1x4x256xf32>
    %8 = vector.shape_cast %7 : vector<1x4x256xf32> to vector<4x256xf32>
    %c0_7 = arith.constant 0 : index
    %c0_8 = arith.constant 0 : index
    %c0_9 = arith.constant 0 : index
    %9 = vector.load %arg4[%c0_7, %c0_8, %c0_9] : memref<1x4x256xf32, #tpu.memory_space<vmem>>, vector<1x4x256xf32>
    %10 = vector.shape_cast %9 : vector<1x4x256xf32> to vector<4x256xf32>
    %c0_10 = arith.constant 0 : index
    %c0_11 = arith.constant 0 : index
    %11 = vector.load %arg5[%c0_10, %c0_11] : memref<32x4xf32, #tpu.memory_space<vmem>>, vector<32x4xf32>
    %c0_12 = arith.constant 0 : index
    %c0_13 = arith.constant 0 : index
    %12 = vector.load %arg6[%c0_12, %c0_13] : memref<32x1xf32, #tpu.memory_space<vmem>>, vector<32x1xf32>
    %c0_14 = arith.constant 0 : index
    %c0_15 = arith.constant 0 : index
    %13 = vector.load %arg7[%c0_14, %c0_15] : memref<4x32xf32, #tpu.memory_space<vmem>>, vector<4x32xf32>
    %c0_16 = arith.constant 0 : index
    %c0_17 = arith.constant 0 : index
    %14 = vector.load %arg8[%c0_16, %c0_17] : memref<4x1xf32, #tpu.memory_space<vmem>>, vector<4x1xf32>
    %cst = arith.constant dense<0.000000e+00> : vector<32x256xf32>
    %15 = tpu.matmul %11, %6, %cst {dimension_numbers = #tpu.dot_dimension_numbers<[1], [0], [0], [1], [0, 0, 1, 1], [], []>, precision = #tpu.contract_precision<fp32>} : vector<32x4xf32>, vector<4x256xf32>, vector<32x256xf32> -> vector<32x256xf32>
    %16 = vector.broadcast %12 : vector<32x1xf32> to vector<32x256xf32>
    %17 = arith.addf %15, %16 : vector<32x256xf32>
    %18 = math.tanh %17 : vector<32x256xf32>
    %cst_18 = arith.constant dense<0.000000e+00> : vector<4x256xf32>
    %19 = tpu.matmul %13, %18, %cst_18 {dimension_numbers = #tpu.dot_dimension_numbers<[1], [0], [0], [1], [0, 0, 1, 1], [], []>, precision = #tpu.contract_precision<fp32>} : vector<4x32xf32>, vector<32x256xf32>, vector<4x256xf32> -> vector<4x256xf32>
    %20 = vector.broadcast %14 : vector<4x1xf32> to vector<4x256xf32>
    %21 = arith.addf %19, %20 : vector<4x256xf32>
    %22 = arith.subf %21, %6 : vector<4x256xf32>
    %23 = arith.subf %6, %8 : vector<4x256xf32>
    %24 = arith.mulf %10, %23 : vector<4x256xf32>
    %25 = arith.addf %22, %24 : vector<4x256xf32>
    %26 = arith.mulf %25, %25 : vector<4x256xf32>
    %c0_19 = arith.constant 0 : index
    %27 = memref.load %arg10[%c0_19] : memref<1xf32, #tpu.memory_space<smem>>
    %28 = vector.shape_cast %26 : vector<4x256xf32> to vector<1x4x256xf32>
    %cst_20 = arith.constant dense<0.000000e+00> : vector<1xf32>
    %29 = vector.multi_reduction <add>, %28, %cst_20 [1, 2] : vector<1x4x256xf32> to vector<1xf32>
    %30 = vector.shape_cast %29 : vector<1xf32> to vector<1x1x1xf32>
    %31 = vector.extract %30[0, 0, 0] : f32 from vector<1x1x1xf32>
    %32 = arith.addf %27, %31 : f32
    %c0_21 = arith.constant 0 : index
    %33 = memref.load %arg10[%c0_21] : memref<1xf32, #tpu.memory_space<smem>>
    memref.store %32, %arg10[%c0_21] : memref<1xf32, #tpu.memory_space<smem>>
    %c1_i32 = arith.constant 1 : i32
    %34 = arith.cmpi eq, %arg0, %c1_i32 : i32
    %c0_i32_22 = arith.constant 0 : i32
    %35 = arith.cmpi eq, %arg1, %c0_i32_22 : i32
    %36 = arith.andi %34, %35 : i1
    %37 = arith.extui %36 : i1 to i32
    %c0_i32_23 = arith.constant 0 : i32
    %38 = arith.cmpi ne, %37, %c0_i32_23 : i32
    scf.if %38 {
      %c0_24 = arith.constant 0 : index
      %39 = memref.load %arg10[%c0_24] : memref<1xf32, #tpu.memory_space<smem>>
      %cst_25 = arith.constant 4.8828125E-4 : f32
      %40 = arith.mulf %39, %cst_25 : f32
      %41 = math.sqrt %40 : f32
      %c0_26 = arith.constant 0 : index
      %42 = memref.load %arg9[%c0_26] : memref<1xf32, #tpu.memory_space<smem>>
      memref.store %41, %arg9[%c0_26] : memref<1xf32, #tpu.memory_space<smem>>
    } else {
    }
    return
  }
  func.func @transform_0(%arg0: i32, %arg1: i32) -> (i32, i32, i32) {
    %c0_i32 = arith.constant 0 : i32
    %c0_i32_0 = arith.constant 0 : i32
    return %arg0, %c0_i32, %arg1 : i32, i32, i32
  }
  func.func @transform_1(%arg0: i32, %arg1: i32) -> (i32, i32, i32) {
    %c0_i32 = arith.constant 0 : i32
    %c0_i32_0 = arith.constant 0 : i32
    return %arg0, %c0_i32, %arg1 : i32, i32, i32
  }
  func.func @transform_2(%arg0: i32, %arg1: i32) -> (i32, i32, i32) {
    %c0_i32 = arith.constant 0 : i32
    %c0_i32_0 = arith.constant 0 : i32
    return %arg0, %c0_i32, %arg1 : i32, i32, i32
  }
  func.func @transform_3(%arg0: i32, %arg1: i32) -> (i32, i32) {
    %c0_i32 = arith.constant 0 : i32
    %c0_i32_0 = arith.constant 0 : i32
    %c0_i32_1 = arith.constant 0 : i32
    return %c0_i32, %c0_i32_0 : i32, i32
  }
  func.func @transform_4(%arg0: i32, %arg1: i32) -> (i32, i32) {
    %c0_i32 = arith.constant 0 : i32
    %c0_i32_0 = arith.constant 0 : i32
    %c0_i32_1 = arith.constant 0 : i32
    return %c0_i32, %c0_i32_0 : i32, i32
  }
  func.func @transform_5(%arg0: i32, %arg1: i32) -> (i32, i32) {
    %c0_i32 = arith.constant 0 : i32
    %c0_i32_0 = arith.constant 0 : i32
    %c0_i32_1 = arith.constant 0 : i32
    return %c0_i32, %c0_i32_0 : i32, i32
  }
  func.func @transform_6(%arg0: i32, %arg1: i32) -> (i32, i32) {
    %c0_i32 = arith.constant 0 : i32
    %c0_i32_0 = arith.constant 0 : i32
    %c0_i32_1 = arith.constant 0 : i32
    return %c0_i32, %c0_i32_0 : i32, i32
  }
  func.func @transform_7(%arg0: i32, %arg1: i32) -> i32 {
    %c0_i32 = arith.constant 0 : i32
    %c0_i32_0 = arith.constant 0 : i32
    return %c0_i32 : i32
  }
}

</mosaic_0001>

<llo_original>
// kernel: tpu_custom_call.1
$region0: #{tpu_custom_call.1}
  #allocation0 [shape = 'u32[]', space=smem, size = 0x4, offset = 0x4, fixed_abs, tag = 'smem constant byte address 0x4 - core index']
  #allocation1 [shape = 'u32[144,128]{1,0:T(1,128)}', space=vmem, size = 0x12000, scoped, tag = 'internal scratch']
  #allocation2 [shape = 'f32[1]{0:T(128)}', space=smem, size = 0x200, scoped, tag = 'scratch operand']
  %s0 = inlined_call_operand.vmem [shape: f32[2,4,256], index: 0, kind: input, shape index: {}]
  %s1 = inlined_call_operand.vmem [shape: f32[2,4,256], index: 1, kind: input, shape index: {}]
  %s2 = inlined_call_operand.vmem [shape: f32[2,4,256], index: 2, kind: input, shape index: {}]
  %s3 = inlined_call_operand.vmem [shape: f32[32,4], index: 3, kind: input, shape index: {}]
  %s4 = inlined_call_operand.vmem [shape: f32[32,1], index: 4, kind: input, shape index: {}]
  %s5 = inlined_call_operand.vmem [shape: f32[4,32], index: 5, kind: input, shape index: {}]
  %s6 = inlined_call_operand.vmem [shape: f32[4,1], index: 6, kind: input, shape index: {}]
  %s7 = inlined_call_operand.hbm [shape: f32[1], index: 7, kind: output, shape index: {}]
  %s8 = sld [smem:[#allocation0]]
  $region69: #{tpu_custom_call.1} parent=0
    _
  %s10 = ssub.s32 1, %s8
  %s11 = scalar_select 0, %s10, %s8
  $region1: #{tpu_custom_call.1} parent=0
    #allocation3 [shape = 'u8[512]{0}', space=smem, size = 0x200, scoped, tag = 'output window, operand 0, single buffered']
    #allocation4 [shape = 's32[2]{0}', space=sflag, size = 0x8, scoped, tag = 'scoped memory for tpu_custom_call.1']
    %12 = vsyncpa [#allocation4], 0
    loop: start=0, step=1, limit=4
    $region2: #{tpu_custom_call.1} parent=1 // loop_pre_header
      _
    $region3: #{tpu_custom_call.1} parent=1 // loop_header
      %s14 = sphi 0, %s18
      %p15 = scmp.ge.s32.totalorder %s14, 4
      %s21 = sphi 0, %s33
      %s22 = sphi 0, %s29
      %s23 = sphi 0, %s21
      %s24 = sphi 0, %s22
      %s25 = sphi 0, %s23
      %s26 = sphi 0, %s24
      %s38 = sphi 0, %s40
      %s41 = sphi 0, %s38
      %s42 = sphi 0, %s41
      %s58 = sphi 0, %s42
      %s66 = sphi 0, %s68
      %s69 = sphi 0, %s66
      %s70 = sphi 0, %s69
      %s86 = sphi 0, %s70
      %s94 = sphi 0, %s96
      %s97 = sphi 0, %s94
      %s98 = sphi 0, %s97
      %s114 = sphi 0, %s98
      %s118 = sphi 0, %s118
      %s120 = sphi 0, %s118
      %s121 = sphi 0, %s120
      %s135 = sphi 0, %s121
      %s139 = sphi 0, %s139
      %s141 = sphi 0, %s139
      %s142 = sphi 0, %s141
      %s156 = sphi 0, %s142
      %s160 = sphi 0, %s160
      %s162 = sphi 0, %s160
      %s163 = sphi 0, %s162
      %s177 = sphi 0, %s163
      %s181 = sphi 0, %s181
      %s183 = sphi 0, %s181
      %s184 = sphi 0, %s183
      %s198 = sphi 0, %s184
      %s202 = sphi 0, %s202
      %s204 = sphi 0, %s202
      %s205 = sphi 0, %s204
      %s219 = sphi 0, %s205
    $region4: #{tpu_custom_call.1} parent=1 // loop_header_branch
      %17 = sbr.rel (%p15) target = $region8
    $region5: #{tpu_custom_call.1} parent=1 // loop_body
      %s19 = ssub.s32 %s14, 1
      %s20 = ssub.s32 %s14, 2
      %s27 = sadd.s32 1, %s22
      %p28 = scmp.ge.s32.totalorder %s27, 1
      %s29 = scalar_select %p28, 0, %s27
      %s30 = sadd.s32 1, %s21
      %s31 = scalar_select %p28, %s30, %s21
      %p32 = scmp.ge.s32.totalorder %s31, 2
      %s33 = scalar_select %p32, 0, %s31
      %s34 = ssub.s32 %s21, %s33
      %s35 = ssub.s32 %s22, %s29
      %s36 = sor.u32 %s34, %s35
      %p37 = scmp.eq.s32.totalorder %s36, 0
      %s39 = sadd.s32 %s38, 1
      %s40 = scalar_select %p37, %s38, %s39
      %p43 = pneg %p37
      %p44 = scmp.eq.s32.totalorder %s14, 1
      %p45 = por %p43, %p44
      %p46 = scmp.ne.s32.totalorder %s38, %s41
      %p47 = scmp.eq.s32.totalorder %s14, 0
      %p48 = por %p46, %p47
      %p49 = scmp.ne.s32.totalorder %s38, %s41
      %p50 = scmp.eq.s32.totalorder %s19, 1
      %p51 = por %p49, %p50
      %p52 = scmp.ne.s32.totalorder %s41, %s42
      %p53 = scmp.eq.s32.totalorder %s19, 0
      %p54 = por %p52, %p53
      %p55 = scmp.ne.s32.totalorder %s41, %s42
      %p56 = scmp.eq.s32.totalorder %s20, 1
      %p57 = por %p55, %p56
      %p59 = scmp.ne.s32.totalorder %s42, %s58
      %p60 = scmp.eq.s32.totalorder %s20, 0
      %p61 = por %p59, %p60
      %s62 = ssub.s32 %s21, %s33
      %s63 = ssub.s32 %s22, %s29
      %s64 = sor.u32 %s62, %s63
      %p65 = scmp.eq.s32.totalorder %s64, 0
      %s67 = sadd.s32 %s66, 1
      %s68 = scalar_select %p65, %s66, %s67
      %p71 = pneg %p65
      %p72 = scmp.eq.s32.totalorder %s14, 1
      %p73 = por %p71, %p72
      %p74 = scmp.ne.s32.totalorder %s66, %s69
      %p75 = scmp.eq.s32.totalorder %s14, 0
      %p76 = por %p74, %p75
      %p77 = scmp.ne.s32.totalorder %s66, %s69
      %p78 = scmp.eq.s32.totalorder %s19, 1
      %p79 = por %p77, %p78
      %p80 = scmp.ne.s32.totalorder %s69, %s70
      %p81 = scmp.eq.s32.totalorder %s19, 0
      %p82 = por %p80, %p81
      %p83 = scmp.ne.s32.totalorder %s69, %s70
      %p84 = scmp.eq.s32.totalorder %s20, 1
      %p85 = por %p83, %p84
      %p87 = scmp.ne.s32.totalorder %s70, %s86
      %p88 = scmp.eq.s32.totalorder %s20, 0
      %p89 = por %p87, %p88
      %s90 = ssub.s32 %s21, %s33
      %s91 = ssub.s32 %s22, %s29
      %s92 = sor.u32 %s90, %s91
      %p93 = scmp.eq.s32.totalorder %s92, 0
      %s95 = sadd.s32 %s94, 1
      %s96 = scalar_select %p93, %s94, %s95
      %p99 = pneg %p93
      %p100 = scmp.eq.s32.totalorder %s14, 1
      %p101 = por %p99, %p100
      %p102 = scmp.ne.s32.totalorder %s94, %s97
      %p103 = scmp.eq.s32.totalorder %s14, 0
      %p104 = por %p102, %p103
      %p105 = scmp.ne.s32.totalorder %s94, %s97
      %p106 = scmp.eq.s32.totalorder %s19, 1
      %p107 = por %p105, %p106
      %p108 = scmp.ne.s32.totalorder %s97, %s98
      %p109 = scmp.eq.s32.totalorder %s19, 0
      %p110 = por %p108, %p109
      %p111 = scmp.ne.s32.totalorder %s97, %s98
      %p112 = scmp.eq.s32.totalorder %s20, 1
      %p113 = por %p111, %p112
      %p115 = scmp.ne.s32.totalorder %s98, %s114
      %p116 = scmp.eq.s32.totalorder %s20, 0
      %p117 = por %p115, %p116
      %s119 = sadd.s32 %s118, 1
      %p122 = scmp.eq.s32.totalorder %s14, 1
      %p123 = scmp.ne.s32.totalorder %s118, %s120
      %p124 = scmp.eq.s32.totalorder %s14, 0
      %p125 = por %p123, %p124
      %p126 = scmp.ne.s32.totalorder %s118, %s120
      %p127 = scmp.eq.s32.totalorder %s19, 1
      %p128 = por %p126, %p127
      %p129 = scmp.ne.s32.totalorder %s120, %s121
      %p130 = scmp.eq.s32.totalorder %s19, 0
      %p131 = por %p129, %p130
      %p132 = scmp.ne.s32.totalorder %s120, %s121
      %p133 = scmp.eq.s32.totalorder %s20, 1
      %p134 = por %p132, %p133
      %p136 = scmp.ne.s32.totalorder %s121, %s135
      %p137 = scmp.eq.s32.totalorder %s20, 0
      %p138 = por %p136, %p137
      %s140 = sadd.s32 %s139, 1
      %p143 = scmp.eq.s32.totalorder %s14, 1
      %p144 = scmp.ne.s32.totalorder %s139, %s141
      %p145 = scmp.eq.s32.totalorder %s14, 0
      %p146 = por %p144, %p145
      %p147 = scmp.ne.s32.totalorder %s139, %s141
      %p148 = scmp.eq.s32.totalorder %s19, 1
      %p149 = por %p147, %p148
      %p150 = scmp.ne.s32.totalorder %s141, %s142
      %p151 = scmp.eq.s32.totalorder %s19, 0
      %p152 = por %p150, %p151
      %p153 = scmp.ne.s32.totalorder %s141, %s142
      %p154 = scmp.eq.s32.totalorder %s20, 1
      %p155 = por %p153, %p154
      %p157 = scmp.ne.s32.totalorder %s142, %s156
      %p158 = scmp.eq.s32.totalorder %s20, 0
      %p159 = por %p157, %p158
      %s161 = sadd.s32 %s160, 1
      %p164 = scmp.eq.s32.totalorder %s14, 1
      %p165 = scmp.ne.s32.totalorder %s160, %s162
      %p166 = scmp.eq.s32.totalorder %s14, 0
      %p167 = por %p165, %p166
      %p168 = scmp.ne.s32.totalorder %s160, %s162
      %p169 = scmp.eq.s32.totalorder %s19, 1
      %p170 = por %p168, %p169
      %p171 = scmp.ne.s32.totalorder %s162, %s163
      %p172 = scmp.eq.s32.totalorder %s19, 0
      %p173 = por %p171, %p172
      %p174 = scmp.ne.s32.totalorder %s162, %s163
      %p175 = scmp.eq.s32.totalorder %s20, 1
      %p176 = por %p174, %p175
      %p178 = scmp.ne.s32.totalorder %s163, %s177
      %p179 = scmp.eq.s32.totalorder %s20, 0
      %p180 = por %p178, %p179
      %s182 = sadd.s32 %s181, 1
      %p185 = scmp.eq.s32.totalorder %s14, 1
      %p186 = scmp.ne.s32.totalorder %s181, %s183
      %p187 = scmp.eq.s32.totalorder %s14, 0
      %p188 = por %p186, %p187
      %p189 = scmp.ne.s32.totalorder %s181, %s183
      %p190 = scmp.eq.s32.totalorder %s19, 1
      %p191 = por %p189, %p190
      %p192 = scmp.ne.s32.totalorder %s183, %s184
      %p193 = scmp.eq.s32.totalorder %s19, 0
      %p194 = por %p192, %p193
      %p195 = scmp.ne.s32.totalorder %s183, %s184
      %p196 = scmp.eq.s32.totalorder %s20, 1
      %p197 = por %p195, %p196
      %p199 = scmp.ne.s32.totalorder %s184, %s198
      %p200 = scmp.eq.s32.totalorder %s20, 0
      %p201 = por %p199, %p200
      %s203 = sadd.s32 %s202, 1
      %p206 = scmp.eq.s32.totalorder %s14, 1
      %p207 = scmp.ne.s32.totalorder %s202, %s204
      %p208 = scmp.eq.s32.totalorder %s14, 0
      %p209 = por %p207, %p208
      %p210 = scmp.ne.s32.totalorder %s202, %s204
      %p211 = scmp.eq.s32.totalorder %s19, 1
      %p212 = por %p210, %p211
      %p213 = scmp.ne.s32.totalorder %s204, %s205
      %p214 = scmp.eq.s32.totalorder %s19, 0
      %p215 = por %p213, %p214
      %p216 = scmp.ne.s32.totalorder %s204, %s205
      %p217 = scmp.eq.s32.totalorder %s20, 1
      %p218 = por %p216, %p217
      %p220 = scmp.ne.s32.totalorder %s205, %s219
      %p221 = scmp.eq.s32.totalorder %s20, 0
      %p222 = por %p220, %p221
      %p223 = scmp.le.s32.totalorder 1, %s14
      %p224 = scmp.lt.s32.totalorder %s14, 3
      %p225 = pnand %p223, %p224
      %p226 = pneg %p225
      // Predicated region
      $region9: #{tpu_custom_call.1} parent=5 // pred_check
        _
      $region10: #{tpu_custom_call.1} parent=5 // pred_check_branch
        %228 = sbr.rel (%p225) target = $region12
      $region11: #{tpu_custom_call.1} parent=5 // pred_region
        %s229 = ssub.s32 %s14, 1
        // Predicated region
        $region13: #{tpu_custom_call.1} parent=11 // pred_check
          %p230 = pneg %p131
        $region14: #{tpu_custom_call.1} parent=11 // pred_check_branch
          %232 = sbr.rel (%p230) target = $region16
        $region15: #{tpu_custom_call.1} parent=11 // pred_region
          _
        $region16: #{tpu_custom_call.1} parent=11 // pred_fallthru
          _
        // Predicated region
        $region17: #{tpu_custom_call.1} parent=11 // pred_check
          %p233 = pneg %p152
        $region18: #{tpu_custom_call.1} parent=11 // pred_check_branch
          %235 = sbr.rel (%p233) target = $region20
        $region19: #{tpu_custom_call.1} parent=11 // pred_region
          _
        $region20: #{tpu_custom_call.1} parent=11 // pred_fallthru
          _
        // Predicated region
        $region21: #{tpu_custom_call.1} parent=11 // pred_check
          %p236 = pneg %p173
        $region22: #{tpu_custom_call.1} parent=11 // pred_check_branch
          %238 = sbr.rel (%p236) target = $region24
        $region23: #{tpu_custom_call.1} parent=11 // pred_region
          _
        $region24: #{tpu_custom_call.1} parent=11 // pred_fallthru
          _
        // Predicated region
        $region25: #{tpu_custom_call.1} parent=11 // pred_check
          %p239 = pneg %p194
        $region26: #{tpu_custom_call.1} parent=11 // pred_check_branch
          %241 = sbr.rel (%p239) target = $region28
        $region27: #{tpu_custom_call.1} parent=11 // pred_region
          _
        $region28: #{tpu_custom_call.1} parent=11 // pred_fallthru
          _
      $region12: #{tpu_custom_call.1} parent=5 // pred_fallthru
        _
      %p242 = scmp.lt.s32.totalorder %s14, 2
      // Predicated region
      $region29: #{tpu_custom_call.1} parent=5 // pred_check
        %p243 = pneg %p242
      $region30: #{tpu_custom_call.1} parent=5 // pred_check_branch
        %245 = sbr.rel (%p243) target = $region32
      $region31: #{tpu_custom_call.1} parent=5 // pred_region
        // Predicated region
        $region33: #{tpu_custom_call.1} parent=31 // pred_check
          %p246 = pneg %p48
        $region34: #{tpu_custom_call.1} parent=31 // pred_check_branch
          %248 = sbr.rel (%p246) target = $region36
        $region35: #{tpu_custom_call.1} parent=31 // pred_region
          %s249 = smul.u32 2, %s22
          %p250 = scmp.lt.s32.totalorder %s21, 1
          %s251 = scalar_select %p250, %s21, 1
          %p252 = scmp.lt.s32.totalorder %s249, 1
          %s253 = scalar_select %p252, %s249, 1
          %s254 = smul.addr %s251, 2
          %s255 = sadd.s32 %s253, %s254
          %s256 = smul.addr %s255, 4
          %s257 = scalar_lea.vmem %s0, %s256
          %s258 = smul.u32 2, %s22
        $region36: #{tpu_custom_call.1} parent=31 // pred_fallthru
          _
        // Predicated region
        $region37: #{tpu_custom_call.1} parent=31 // pred_check
          %p259 = pneg %p76
        $region38: #{tpu_custom_call.1} parent=31 // pred_check_branch
          %261 = sbr.rel (%p259) target = $region40
        $region39: #{tpu_custom_call.1} parent=31 // pred_region
          %s262 = smul.u32 2, %s22
          %p263 = scmp.lt.s32.totalorder %s21, 1
          %s264 = scalar_select %p263, %s21, 1
          %p265 = scmp.lt.s32.totalorder %s262, 1
          %s266 = scalar_select %p265, %s262, 1
          %s267 = smul.addr %s264, 2
          %s268 = sadd.s32 %s266, %s267
          %s269 = smul.addr %s268, 4
          %s270 = scalar_lea.vmem %s1, %s269
          %s271 = smul.u32 2, %s22
        $region40: #{tpu_custom_call.1} parent=31 // pred_fallthru
          _
        // Predicated region
        $region41: #{tpu_custom_call.1} parent=31 // pred_check
          %p272 = pneg %p104
        $region42: #{tpu_custom_call.1} parent=31 // pred_check_branch
          %274 = sbr.rel (%p272) target = $region44
        $region43: #{tpu_custom_call.1} parent=31 // pred_region
          %s275 = smul.u32 2, %s22
          %p276 = scmp.lt.s32.totalorder %s21, 1
          %s277 = scalar_select %p276, %s21, 1
          %p278 = scmp.lt.s32.totalorder %s275, 1
          %s279 = scalar_select %p278, %s275, 1
          %s280 = smul.addr %s277, 2
          %s281 = sadd.s32 %s279, %s280
          %s282 = smul.addr %s281, 4
          %s283 = scalar_lea.vmem %s2, %s282
          %s284 = smul.u32 2, %s22
        $region44: #{tpu_custom_call.1} parent=31 // pred_fallthru
          _
      $region32: #{tpu_custom_call.1} parent=5 // pred_fallthru
        _
      %p285 = scmp.le.s32.totalorder 1, %s14
      %p286 = scmp.lt.s32.totalorder %s14, 3
      %p287 = pnand %p285, %p286
      %p288 = pneg %p287
      // Predicated region
      $region45: #{tpu_custom_call.1} parent=5 // pred_check
        _
      $region46: #{tpu_custom_call.1} parent=5 // pred_check_branch
        %290 = sbr.rel (%p287) target = $region48
      $region47: #{tpu_custom_call.1} parent=5 // pred_region
        %s291 = ssub.s32 %s14, 1
        %s292 = smul.u32 2, %s24
        %p293 = scmp.lt.s32.totalorder %s23, 1
        %s294 = scalar_select %p293, %s23, 1
        %p295 = scmp.lt.s32.totalorder %s292, 1
        %s296 = scalar_select %p295, %s292, 1
        %s297 = smul.addr %s294, 2
        %s298 = sadd.s32 %s296, %s297
        %s299 = smul.addr %s298, 4
        %s300 = scalar_lea.vmem %s0, %s299
        %p301 = pneg %p54
        %p302 = pneg %p51
        %s303 = smul.u32 2, %s24
        %p304 = scmp.lt.s32.totalorder %s23, 1
        %s305 = scalar_select %p304, %s23, 1
        %p306 = scmp.lt.s32.totalorder %s303, 1
        %s307 = scalar_select %p306, %s303, 1
        %s308 = smul.addr %s305, 2
        %s309 = sadd.s32 %s307, %s308
        %s310 = smul.addr %s309, 4
        %s311 = scalar_lea.vmem %s1, %s310
        %p312 = pneg %p82
        %p313 = pneg %p79
        %s314 = smul.u32 2, %s24
        %p315 = scmp.lt.s32.totalorder %s23, 1
        %s316 = scalar_select %p315, %s23, 1
        %p317 = scmp.lt.s32.totalorder %s314, 1
        %s318 = scalar_select %p317, %s314, 1
        %s319 = smul.addr %s316, 2
        %s320 = sadd.s32 %s318, %s319
        %s321 = smul.addr %s320, 4
        %s322 = scalar_lea.vmem %s2, %s321
        %p323 = pneg %p110
        %p324 = pneg %p107
        %p325 = pneg %p131
        %p326 = pneg %p128
        %p327 = pneg %p152
        %p328 = pneg %p149
        %p329 = pneg %p173
        %p330 = pneg %p170
        %p331 = pneg %p194
        %p332 = pneg %p191
        %p333 = pneg %p215
        %p334 = pneg %p212
        %s335 = smul.u32 2, %s24
        %p336 = scmp.lt.s32.totalorder %s23, 1
        %s337 = scalar_select %p336, %s23, 1
        %p338 = scmp.lt.s32.totalorder %s335, 1
        %s339 = scalar_select %p338, %s335, 1
        %s340 = smul.addr %s337, 2
        %s341 = sadd.s32 %s339, %s340
        %s342 = smul.addr %s341, 4
        %s343 = scalar_lea.vmem %s0, %s342
        %s344 = smul.u32 2, %s24
        %s345 = smul.u32 2, %s24
        %p346 = scmp.lt.s32.totalorder %s23, 1
        %s347 = scalar_select %p346, %s23, 1
        %p348 = scmp.lt.s32.totalorder %s345, 1
        %s349 = scalar_select %p348, %s345, 1
        %s350 = smul.addr %s347, 2
        %s351 = sadd.s32 %s349, %s350
        %s352 = smul.addr %s351, 4
        %s353 = scalar_lea.vmem %s1, %s352
        %s354 = smul.u32 2, %s24
        %s355 = smul.u32 2, %s24
        %p356 = scmp.lt.s32.totalorder %s23, 1
        %s357 = scalar_select %p356, %s23, 1
        %p358 = scmp.lt.s32.totalorder %s355, 1
        %s359 = scalar_select %p358, %s355, 1
        %s360 = smul.addr %s357, 2
        %s361 = sadd.s32 %s359, %s360
        %s362 = smul.addr %s361, 4
        %s363 = scalar_lea.vmem %s2, %s362
        %s364 = smul.u32 2, %s24
        %p365 = scmp.eq.s32.totalorder %s23, 0
        %p366 = scmp.eq.s32.totalorder %s24, 0
        %p367 = pnand %p365, %p366
        %p368 = pneg %p367
        // Predicated region
        $region49: #{tpu_custom_call.1} parent=47 // pred_check
          _
        $region50: #{tpu_custom_call.1} parent=47 // pred_check_branch
          %370 = sbr.rel (%p367) target = $region52
        $region51: #{tpu_custom_call.1} parent=47 // pred_region
          %s371 = scalar_lea.smem [#allocation2], 0
          %372 = sst [smem:[%s371]] 0.0
        $region52: #{tpu_custom_call.1} parent=47 // pred_fallthru
          _
        %v373 = vld [vmem:[%s343] sm:$0xff]
        %v374 = vld [vmem:[%s353] sm:$0xff]
        %v375 = vld [vmem:[%s363] sm:$0xff]
        %v376 = vld [vmem:[%s3] sm:$0xff]
        %v377 = vld [vmem:[%s3 + $0x8] sm:$0xff]
        %v378 = vld [vmem:[%s3 + $0x10] sm:$0xff]
        %v379 = vld [vmem:[%s3 + $0x18] sm:$0xff]
        %v380 = vld [vmem:[%s4] sm:$0xff]
        %v381 = vld [vmem:[%s4 + $0x8] sm:$0xff]
        %v382 = vld [vmem:[%s4 + $0x10] sm:$0xff]
        %v383 = vld [vmem:[%s4 + $0x18] sm:$0xff]
        %v384 = vld [vmem:[%s5] sm:$0xf]
        %v385 = vld [vmem:[%s6] sm:$0xf]
        %387 = vset.pattern.permute.xlu0 0
        %388 = vperm.xlu0 %387, %v380
        %v389 = vpop.permute.xlu0 %388
        %392 = vset.pattern.permute.xlu0 0
        %393 = vperm.xlu0 %392, %v381
        %v394 = vpop.permute.xlu0 %393
        %397 = vset.pattern.permute.xlu0 0
        %398 = vperm.xlu0 %397, %v382
        %v399 = vpop.permute.xlu0 %398
        %402 = vset.pattern.permute.xlu0 0
        %403 = vperm.xlu0 %402, %v383
        %v404 = vpop.permute.xlu0 %403
        %v407 = vcombine.high %v373, %v373
        %vm408 = vcmask 31744
        %v410 = vsel %vm408, %v376, 0
        %v413 = vsel %vm408, %v377, 0
        %v416 = vsel %vm408, %v378, 0
        %v419 = vsel %vm408, %v379, 0
        %vm421 = vcmask 1043456
        %v422 = vsel %vm421, %v373, 0
        %v424 = vsel %vm421, %v407, 0
        %426 = vmatprep.subr.mxu0 0.0
        %427 = vmatpush1.msra.mxu0 0.0
        %428 = vmatprep.subr.mxu0 0.0
        %429 = vmatpush1.msra.mxu0 0.0
        %430 = vmatprep.subr.mxu0 0.0
        %431 = vmatpush1.msra.mxu0 0.0
        %432 = vmatprep.subr.mxu0 0.0
        %433 = vmatpush1.msra.mxu0 0.0
        %434 = vmatprep.subr.mxu0 0.0
        %435 = vmatpush1.msra.mxu0 0.0
        %436 = vmatprep.subr.mxu0 0.0
        %437 = vmatpush1.msra.mxu0 0.0
        %438 = vmatprep.subr.mxu0 0.0
        %439 = vmatpush1.msra.mxu0 0.0
        %440 = vmatprep.subr.mxu0 0.0
        %441 = vmatpush1.msra.mxu0 0.0
        %442 = vmatprep.subr.mxu0 0.0
        %443 = vmatpush1.msra.mxu0 0.0
        %444 = vmatprep.subr.mxu0 0.0
        %445 = vmatpush1.msra.mxu0 0.0
        %446 = vmatprep.subr.mxu0 0.0
        %447 = vmatpush1.msra.mxu0 0.0
        %448 = vmatprep.subr.mxu0 0.0
        %449 = vmatpush1.msra.mxu0 0.0
        %450 = vmatprep.subr.mxu0 0.0
        %451 = vmatpush1.msra.mxu0 0.0
        %452 = vmatprep.subr.mxu0 0.0
        %453 = vmatpush1.msra.mxu0 0.0
        %454 = vmatprep.subr.mxu0 0.0
        %455 = vmatpush1.msra.mxu0 0.0
        %v456 = vand.u32 %v424, 4294901760
        %457 = vmatprep.subr.mxu0 %v456
        %v458 = vand.u32 %v422, 4294901760
        %459 = vmatpush1.msra.mxu0 %v458
        %460 = vmatprep.subr.mxu0 0.0
        %461 = vmatpush2.msra.mxu0 0.0
        %462 = vmatprep.subr.mxu0 0.0
        %463 = vmatpush2.msra.mxu0 0.0
        %464 = vmatprep.subr.mxu0 0.0
        %465 = vmatpush2.msra.mxu0 0.0
        %466 = vmatprep.subr.mxu0 0.0
        %467 = vmatpush2.msra.mxu0 0.0
        %468 = vmatprep.subr.mxu0 0.0
        %469 = vmatpush2.msra.mxu0 0.0
        %470 = vmatprep.subr.mxu0 0.0
        %471 = vmatpush2.msra.mxu0 0.0
        %472 = vmatprep.subr.mxu0 0.0
        %473 = vmatpush2.msra.mxu0 0.0
        %474 = vmatprep.subr.mxu0 0.0
        %475 = vmatpush2.msra.mxu0 0.0
        %476 = vmatprep.subr.mxu0 0.0
        %477 = vmatpush2.msra.mxu0 0.0
        %478 = vmatprep.subr.mxu0 0.0
        %479 = vmatpush2.msra.mxu0 0.0
        %480 = vmatprep.subr.mxu0 0.0
        %481 = vmatpush2.msra.mxu0 0.0
        %482 = vmatprep.subr.mxu0 0.0
        %483 = vmatpush2.msra.mxu0 0.0
        %484 = vmatprep.subr.mxu0 0.0
        %485 = vmatpush2.msra.mxu0 0.0
        %486 = vmatprep.subr.mxu0 0.0
        %487 = vmatpush2.msra.mxu0 0.0
        %488 = vmatprep.subr.mxu0 0.0
        %489 = vmatpush2.msra.mxu0 0.0
        %490 = vmatprep.subr.mxu0 0.0
        %491 = vmatpush2.msra.mxu0 0.0
        %492 = vmatprep.mubr.f32.mxu0 0.0
        %v493 = vand.u32 %v410, 4294901760
        %v494 = vsub.f32 %v410, %v493
        %v495 = vand.u32 %v494, 4294901760
        %v496 = vsub.f32 %v494, %v495
        %v497 = vand.u32 %v496, 4294901760
        %498 = vmatmul.mubr.f32.gmra.mxu0 %v497
        %v499 = vpop.f32.mrf.mxu0
        %v500 = vadd.f32 %v389, %v499
        %v501 = vpop.f32.mrf.mxu0
        %v502 = vadd.f32 %v389, %v501
        %503 = vmatprep.mubr.f32.mxu0 0.0
        %v504 = vand.u32 %v413, 4294901760
        %v505 = vsub.f32 %v413, %v504
        %v506 = vand.u32 %v505, 4294901760
        %v507 = vsub.f32 %v505, %v506
        %v508 = vand.u32 %v507, 4294901760
        %509 = vmatmul.mubr.f32.gmra.mxu0 %v508
        %v510 = vpop.f32.mrf.mxu0
        %v511 = vadd.f32 %v394, %v510
        %v512 = vpop.f32.mrf.mxu0
        %v513 = vadd.f32 %v394, %v512
        %514 = vmatprep.mubr.f32.mxu0 0.0
        %v515 = vand.u32 %v416, 4294901760
        %v516 = vsub.f32 %v416, %v515
        %v517 = vand.u32 %v516, 4294901760
        %v518 = vsub.f32 %v516, %v517
        %v519 = vand.u32 %v518, 4294901760
        %520 = vmatmul.mubr.f32.gmra.mxu0 %v519
        %v521 = vpop.f32.mrf.mxu0
        %v522 = vadd.f32 %v399, %v521
        %v523 = vpop.f32.mrf.mxu0
        %v524 = vadd.f32 %v399, %v523
        %525 = vmatprep.mubr.f32.mxu0 0.0
        %v526 = vand.u32 %v419, 4294901760
        %v527 = vsub.f32 %v419, %v526
        %v528 = vand.u32 %v527, 4294901760
        %v529 = vsub.f32 %v527, %v528
        %v530 = vand.u32 %v529, 4294901760
        %531 = vmatmul.mubr.f32.gmra.mxu0 %v530
        %v532 = vpop.f32.mrf.mxu0
        %v533 = vadd.f32 %v404, %v532
        %v534 = vpop.f32.mrf.mxu0
        %v535 = vadd.f32 %v404, %v534
        %536 = vdwg.mxu0
        %537 = vmatprep.subr.mxu0 0.0
        %538 = vmatpush1.msra.mxu0 0.0
        %539 = vmatprep.subr.mxu0 0.0
        %540 = vmatpush1.msra.mxu0 0.0
        %541 = vmatprep.subr.mxu0 0.0
        %542 = vmatpush1.msra.mxu0 0.0
        %543 = vmatprep.subr.mxu0 0.0
        %544 = vmatpush1.msra.mxu0 0.0
        %545 = vmatprep.subr.mxu0 0.0
        %546 = vmatpush1.msra.mxu0 0.0
        %547 = vmatprep.subr.mxu0 0.0
        %548 = vmatpush1.msra.mxu0 0.0
        %549 = vmatprep.subr.mxu0 0.0
        %550 = vmatpush1.msra.mxu0 0.0
        %551 = vmatprep.subr.mxu0 0.0
        %552 = vmatpush1.msra.mxu0 0.0
        %553 = vmatprep.subr.mxu0 0.0
        %554 = vmatpush1.msra.mxu0 0.0
        %555 = vmatprep.subr.mxu0 0.0
        %556 = vmatpush1.msra.mxu0 0.0
        %557 = vmatprep.subr.mxu0 0.0
        %558 = vmatpush1.msra.mxu0 0.0
        %559 = vmatprep.subr.mxu0 0.0
        %560 = vmatpush1.msra.mxu0 0.0
        %561 = vmatprep.subr.mxu0 0.0
        %562 = vmatpush1.msra.mxu0 0.0
        %563 = vmatprep.subr.mxu0 0.0
        %564 = vmatpush1.msra.mxu0 0.0
        %565 = vmatprep.subr.mxu0 0.0
        %566 = vmatpush1.msra.mxu0 0.0
        %v567 = vand.u32 %v424, 4294901760
        %v568 = vsub.f32 %v424, %v567
        %v569 = vand.u32 %v568, 4294901760
        %v570 = vsub.f32 %v568, %v569
        %v571 = vand.u32 %v570, 4294901760
        %572 = vmatprep.subr.mxu0 %v571
        %v573 = vand.u32 %v422, 4294901760
        %v574 = vsub.f32 %v422, %v573
        %v575 = vand.u32 %v574, 4294901760
        %v576 = vsub.f32 %v574, %v575
        %v577 = vand.u32 %v576, 4294901760
        %578 = vmatpush1.msra.mxu0 %v577
        %579 = vmatprep.subr.mxu0 0.0
        %580 = vmatpush2.msra.mxu0 0.0
        %581 = vmatprep.subr.mxu0 0.0
        %582 = vmatpush2.msra.mxu0 0.0
        %583 = vmatprep.subr.mxu0 0.0
        %584 = vmatpush2.msra.mxu0 0.0
        %585 = vmatprep.subr.mxu0 0.0
        %586 = vmatpush2.msra.mxu0 0.0
        %587 = vmatprep.subr.mxu0 0.0
        %588 = vmatpush2.msra.mxu0 0.0
        %589 = vmatprep.subr.mxu0 0.0
        %590 = vmatpush2.msra.mxu0 0.0
        %591 = vmatprep.subr.mxu0 0.0
        %592 = vmatpush2.msra.mxu0 0.0
        %593 = vmatprep.subr.mxu0 0.0
        %594 = vmatpush2.msra.mxu0 0.0
        %595 = vmatprep.subr.mxu0 0.0
        %596 = vmatpush2.msra.mxu0 0.0
        %597 = vmatprep.subr.mxu0 0.0
        %598 = vmatpush2.msra.mxu0 0.0
        %599 = vmatprep.subr.mxu0 0.0
        %600 = vmatpush2.msra.mxu0 0.0
        %601 = vmatprep.subr.mxu0 0.0
        %602 = vmatpush2.msra.mxu0 0.0
        %603 = vmatprep.subr.mxu0 0.0
        %604 = vmatpush2.msra.mxu0 0.0
        %605 = vmatprep.subr.mxu0 0.0
        %606 = vmatpush2.msra.mxu0 0.0
        %607 = vmatprep.subr.mxu0 0.0
        %608 = vmatpush2.msra.mxu0 0.0
        %609 = vmatprep.subr.mxu0 0.0
        %610 = vmatpush2.msra.mxu0 0.0
        %611 = vmatprep.mubr.f32.mxu0 0.0
        %v612 = vand.u32 %v410, 4294901760
        %613 = vmatmul.mubr.f32.gmra.mxu0 %v612
        %v614 = vpop.f32.mrf.mxu0
        %v615 = vadd.f32 %v500, %v614
        %v616 = vpop.f32.mrf.mxu0
        %v617 = vadd.f32 %v502, %v616
        %618 = vmatprep.mubr.f32.mxu0 0.0
        %v619 = vand.u32 %v413, 4294901760
        %620 = vmatmul.mubr.f32.gmra.mxu0 %v619
        %v621 = vpop.f32.mrf.mxu0
        %v622 = vadd.f32 %v511, %v621
        %v623 = vpop.f32.mrf.mxu0
        %v624 = vadd.f32 %v513, %v623
        %625 = vmatprep.mubr.f32.mxu0 0.0
        %v626 = vand.u32 %v416, 4294901760
        %627 = vmatmul.mubr.f32.gmra.mxu0 %v626
        %v628 = vpop.f32.mrf.mxu0
        %v629 = vadd.f32 %v522, %v628
        %v630 = vpop.f32.mrf.mxu0
        %v631 = vadd.f32 %v524, %v630
        %632 = vmatprep.mubr.f32.mxu0 0.0
        %v633 = vand.u32 %v419, 4294901760
        %634 = vmatmul.mubr.f32.gmra.mxu0 %v633
        %v635 = vpop.f32.mrf.mxu0
        %v636 = vadd.f32 %v533, %v635
        %v637 = vpop.f32.mrf.mxu0
        %v638 = vadd.f32 %v535, %v637
        %639 = vdwg.mxu0
        %640 = vmatprep.subr.mxu0 0.0
        %641 = vmatpush1.msra.mxu0 0.0
        %642 = vmatprep.subr.mxu0 0.0
        %643 = vmatpush1.msra.mxu0 0.0
        %644 = vmatprep.subr.mxu0 0.0
        %645 = vmatpush1.msra.mxu0 0.0
        %646 = vmatprep.subr.mxu0 0.0
        %647 = vmatpush1.msra.mxu0 0.0
        %648 = vmatprep.subr.mxu0 0.0
        %649 = vmatpush1.msra.mxu0 0.0
        %650 = vmatprep.subr.mxu0 0.0
        %651 = vmatpush1.msra.mxu0 0.0
        %652 = vmatprep.subr.mxu0 0.0
        %653 = vmatpush1.msra.mxu0 0.0
        %654 = vmatprep.subr.mxu0 0.0
        %655 = vmatpush1.msra.mxu0 0.0
        %656 = vmatprep.subr.mxu0 0.0
        %657 = vmatpush1.msra.mxu0 0.0
        %658 = vmatprep.subr.mxu0 0.0
        %659 = vmatpush1.msra.mxu0 0.0
        %660 = vmatprep.subr.mxu0 0.0
        %661 = vmatpush1.msra.mxu0 0.0
        %662 = vmatprep.subr.mxu0 0.0
        %663 = vmatpush1.msra.mxu0 0.0
        %664 = vmatprep.subr.mxu0 0.0
        %665 = vmatpush1.msra.mxu0 0.0
        %666 = vmatprep.subr.mxu0 0.0
        %667 = vmatpush1.msra.mxu0 0.0
        %668 = vmatprep.subr.mxu0 0.0
        %669 = vmatpush1.msra.mxu0 0.0
        %v670 = vand.u32 %v424, 4294901760
        %v671 = vsub.f32 %v424, %v670
        %672 = vmatprep.subr.mxu0 %v671
        %v673 = vand.u32 %v422, 4294901760
        %v674 = vsub.f32 %v422, %v673
        %675 = vmatpush1.msra.mxu0 %v674
        %676 = vmatprep.subr.mxu0 0.0
        %677 = vmatpush2.msra.mxu0 0.0
        %678 = vmatprep.subr.mxu0 0.0
        %679 = vmatpush2.msra.mxu0 0.0
        %680 = vmatprep.subr.mxu0 0.0
        %681 = vmatpush2.msra.mxu0 0.0
        %682 = vmatprep.subr.mxu0 0.0
        %683 = vmatpush2.msra.mxu0 0.0
        %684 = vmatprep.subr.mxu0 0.0
        %685 = vmatpush2.msra.mxu0 0.0
        %686 = vmatprep.subr.mxu0 0.0
        %687 = vmatpush2.msra.mxu0 0.0
        %688 = vmatprep.subr.mxu0 0.0
        %689 = vmatpush2.msra.mxu0 0.0
        %690 = vmatprep.subr.mxu0 0.0
        %691 = vmatpush2.msra.mxu0 0.0
        %692 = vmatprep.subr.mxu0 0.0
        %693 = vmatpush2.msra.mxu0 0.0
        %694 = vmatprep.subr.mxu0 0.0
        %695 = vmatpush2.msra.mxu0 0.0
        %696 = vmatprep.subr.mxu0 0.0
        %697 = vmatpush2.msra.mxu0 0.0
        %698 = vmatprep.subr.mxu0 0.0
        %699 = vmatpush2.msra.mxu0 0.0
        %700 = vmatprep.subr.mxu0 0.0
        %701 = vmatpush2.msra.mxu0 0.0
        %702 = vmatprep.subr.mxu0 0.0
        %703 = vmatpush2.msra.mxu0 0.0
        %704 = vmatprep.subr.mxu0 0.0
        %705 = vmatpush2.msra.mxu0 0.0
        %706 = vmatprep.subr.mxu0 0.0
        %707 = vmatpush2.msra.mxu0 0.0
        %708 = vmatprep.mubr.f32.mxu0 0.0
        %v709 = vand.u32 %v410, 4294901760
        %v710 = vsub.f32 %v410, %v709
        %711 = vmatmul.mubr.f32.gmra.mxu0 %v710
        %v712 = vpop.f32.mrf.mxu0
        %v713 = vadd.f32 %v615, %v712
        %v714 = vpop.f32.mrf.mxu0
        %v715 = vadd.f32 %v617, %v714
        %716 = vmatprep.mubr.f32.mxu0 0.0
        %v717 = vand.u32 %v413, 4294901760
        %v718 = vsub.f32 %v413, %v717
        %719 = vmatmul.mubr.f32.gmra.mxu0 %v718
        %v720 = vpop.f32.mrf.mxu0
        %v721 = vadd.f32 %v622, %v720
        %v722 = vpop.f32.mrf.mxu0
        %v723 = vadd.f32 %v624, %v722
        %724 = vmatprep.mubr.f32.mxu0 0.0
        %v725 = vand.u32 %v416, 4294901760
        %v726 = vsub.f32 %v416, %v725
        %727 = vmatmul.mubr.f32.gmra.mxu0 %v726
        %v728 = vpop.f32.mrf.mxu0
        %v729 = vadd.f32 %v629, %v728
        %v730 = vpop.f32.mrf.mxu0
        %v731 = vadd.f32 %v631, %v730
        %732 = vmatprep.mubr.f32.mxu0 0.0
        %v733 = vand.u32 %v419, 4294901760
        %v734 = vsub.f32 %v419, %v733
        %735 = vmatmul.mubr.f32.gmra.mxu0 %v734
        %v736 = vpop.f32.mrf.mxu0
        %v737 = vadd.f32 %v636, %v736
        %v738 = vpop.f32.mrf.mxu0
        %v739 = vadd.f32 %v638, %v738
        %740 = vdwg.mxu0
        %741 = vmatprep.subr.mxu0 0.0
        %742 = vmatpush1.msra.mxu0 0.0
        %743 = vmatprep.subr.mxu0 0.0
        %744 = vmatpush1.msra.mxu0 0.0
        %745 = vmatprep.subr.mxu0 0.0
        %746 = vmatpush1.msra.mxu0 0.0
        %747 = vmatprep.subr.mxu0 0.0
        %748 = vmatpush1.msra.mxu0 0.0
        %749 = vmatprep.subr.mxu0 0.0
        %750 = vmatpush1.msra.mxu0 0.0
        %751 = vmatprep.subr.mxu0 0.0
        %752 = vmatpush1.msra.mxu0 0.0
        %753 = vmatprep.subr.mxu0 0.0
        %754 = vmatpush1.msra.mxu0 0.0
        %755 = vmatprep.subr.mxu0 0.0
        %756 = vmatpush1.msra.mxu0 0.0
        %757 = vmatprep.subr.mxu0 0.0
        %758 = vmatpush1.msra.mxu0 0.0
        %759 = vmatprep.subr.mxu0 0.0
        %760 = vmatpush1.msra.mxu0 0.0
        %761 = vmatprep.subr.mxu0 0.0
        %762 = vmatpush1.msra.mxu0 0.0
        %763 = vmatprep.subr.mxu0 0.0
        %764 = vmatpush1.msra.mxu0 0.0
        %765 = vmatprep.subr.mxu0 0.0
        %766 = vmatpush1.msra.mxu0 0.0
        %767 = vmatprep.subr.mxu0 0.0
        %768 = vmatpush1.msra.mxu0 0.0
        %769 = vmatprep.subr.mxu0 0.0
        %770 = vmatpush1.msra.mxu0 0.0
        %v771 = vand.u32 %v424, 4294901760
        %772 = vmatprep.subr.mxu0 %v771
        %v773 = vand.u32 %v422, 4294901760
        %774 = vmatpush1.msra.mxu0 %v773
        %775 = vmatprep.subr.mxu0 0.0
        %776 = vmatpush2.msra.mxu0 0.0
        %777 = vmatprep.subr.mxu0 0.0
        %778 = vmatpush2.msra.mxu0 0.0
        %779 = vmatprep.subr.mxu0 0.0
        %780 = vmatpush2.msra.mxu0 0.0
        %781 = vmatprep.subr.mxu0 0.0
        %782 = vmatpush2.msra.mxu0 0.0
        %783 = vmatprep.subr.mxu0 0.0
        %784 = vmatpush2.msra.mxu0 0.0
        %785 = vmatprep.subr.mxu0 0.0
        %786 = vmatpush2.msra.mxu0 0.0
        %787 = vmatprep.subr.mxu0 0.0
        %788 = vmatpush2.msra.mxu0 0.0
        %789 = vmatprep.subr.mxu0 0.0
        %790 = vmatpush2.msra.mxu0 0.0
        %791 = vmatprep.subr.mxu0 0.0
        %792 = vmatpush2.msra.mxu0 0.0
        %793 = vmatprep.subr.mxu0 0.0
        %794 = vmatpush2.msra.mxu0 0.0
        %795 = vmatprep.subr.mxu0 0.0
        %796 = vmatpush2.msra.mxu0 0.0
        %797 = vmatprep.subr.mxu0 0.0
        %798 = vmatpush2.msra.mxu0 0.0
        %799 = vmatprep.subr.mxu0 0.0
        %800 = vmatpush2.msra.mxu0 0.0
        %801 = vmatprep.subr.mxu0 0.0
        %802 = vmatpush2.msra.mxu0 0.0
        %803 = vmatprep.subr.mxu0 0.0
        %804 = vmatpush2.msra.mxu0 0.0
        %805 = vmatprep.subr.mxu0 0.0
        %806 = vmatpush2.msra.mxu0 0.0
        %807 = vmatprep.mubr.f32.mxu0 0.0
        %v808 = vand.u32 %v410, 4294901760
        %v809 = vsub.f32 %v410, %v808
        %v810 = vand.u32 %v809, 4294901760
        %811 = vmatmul.mubr.f32.gmra.mxu0 %v810
        %v812 = vpop.f32.mrf.mxu0
        %v813 = vadd.f32 %v713, %v812
        %v814 = vpop.f32.mrf.mxu0
        %v815 = vadd.f32 %v715, %v814
        %816 = vmatprep.mubr.f32.mxu0 0.0
        %v817 = vand.u32 %v413, 4294901760
        %v818 = vsub.f32 %v413, %v817
        %v819 = vand.u32 %v818, 4294901760
        %820 = vmatmul.mubr.f32.gmra.mxu0 %v819
        %v821 = vpop.f32.mrf.mxu0
        %v822 = vadd.f32 %v721, %v821
        %v823 = vpop.f32.mrf.mxu0
        %v824 = vadd.f32 %v723, %v823
        %825 = vmatprep.mubr.f32.mxu0 0.0
        %v826 = vand.u32 %v416, 4294901760
        %v827 = vsub.f32 %v416, %v826
        %v828 = vand.u32 %v827, 4294901760
        %829 = vmatmul.mubr.f32.gmra.mxu0 %v828
        %v830 = vpop.f32.mrf.mxu0
        %v831 = vadd.f32 %v729, %v830
        %v832 = vpop.f32.mrf.mxu0
        %v833 = vadd.f32 %v731, %v832
        %834 = vmatprep.mubr.f32.mxu0 0.0
        %v835 = vand.u32 %v419, 4294901760
        %v836 = vsub.f32 %v419, %v835
        %v837 = vand.u32 %v836, 4294901760
        %838 = vmatmul.mubr.f32.gmra.mxu0 %v837
        %v839 = vpop.f32.mrf.mxu0
        %v840 = vadd.f32 %v737, %v839
        %v841 = vpop.f32.mrf.mxu0
        %v842 = vadd.f32 %v739, %v841
        %843 = vdwg.mxu0
        %844 = vmatprep.subr.mxu0 0.0
        %845 = vmatpush1.msra.mxu0 0.0
        %846 = vmatprep.subr.mxu0 0.0
        %847 = vmatpush1.msra.mxu0 0.0
        %848 = vmatprep.subr.mxu0 0.0
        %849 = vmatpush1.msra.mxu0 0.0
        %850 = vmatprep.subr.mxu0 0.0
        %851 = vmatpush1.msra.mxu0 0.0
        %852 = vmatprep.subr.mxu0 0.0
        %853 = vmatpush1.msra.mxu0 0.0
        %854 = vmatprep.subr.mxu0 0.0
        %855 = vmatpush1.msra.mxu0 0.0
        %856 = vmatprep.subr.mxu0 0.0
        %857 = vmatpush1.msra.mxu0 0.0
        %858 = vmatprep.subr.mxu0 0.0
        %859 = vmatpush1.msra.mxu0 0.0
        %860 = vmatprep.subr.mxu0 0.0
        %861 = vmatpush1.msra.mxu0 0.0
        %862 = vmatprep.subr.mxu0 0.0
        %863 = vmatpush1.msra.mxu0 0.0
        %864 = vmatprep.subr.mxu0 0.0
        %865 = vmatpush1.msra.mxu0 0.0
        %866 = vmatprep.subr.mxu0 0.0
        %867 = vmatpush1.msra.mxu0 0.0
        %868 = vmatprep.subr.mxu0 0.0
        %869 = vmatpush1.msra.mxu0 0.0
        %870 = vmatprep.subr.mxu0 0.0
        %871 = vmatpush1.msra.mxu0 0.0
        %872 = vmatprep.subr.mxu0 0.0
        %873 = vmatpush1.msra.mxu0 0.0
        %v874 = vand.u32 %v424, 4294901760
        %v875 = vsub.f32 %v424, %v874
        %v876 = vand.u32 %v875, 4294901760
        %877 = vmatprep.subr.mxu0 %v876
        %v878 = vand.u32 %v422, 4294901760
        %v879 = vsub.f32 %v422, %v878
        %v880 = vand.u32 %v879, 4294901760
        %881 = vmatpush1.msra.mxu0 %v880
        %882 = vmatprep.subr.mxu0 0.0
        %883 = vmatpush2.msra.mxu0 0.0
        %884 = vmatprep.subr.mxu0 0.0
        %885 = vmatpush2.msra.mxu0 0.0
        %886 = vmatprep.subr.mxu0 0.0
        %887 = vmatpush2.msra.mxu0 0.0
        %888 = vmatprep.subr.mxu0 0.0
        %889 = vmatpush2.msra.mxu0 0.0
        %890 = vmatprep.subr.mxu0 0.0
        %891 = vmatpush2.msra.mxu0 0.0
        %892 = vmatprep.subr.mxu0 0.0
        %893 = vmatpush2.msra.mxu0 0.0
        %894 = vmatprep.subr.mxu0 0.0
        %895 = vmatpush2.msra.mxu0 0.0
        %896 = vmatprep.subr.mxu0 0.0
        %897 = vmatpush2.msra.mxu0 0.0
        %898 = vmatprep.subr.mxu0 0.0
        %899 = vmatpush2.msra.mxu0 0.0
        %900 = vmatprep.subr.mxu0 0.0
        %901 = vmatpush2.msra.mxu0 0.0
        %902 = vmatprep.subr.mxu0 0.0
        %903 = vmatpush2.msra.mxu0 0.0
        %904 = vmatprep.subr.mxu0 0.0
        %905 = vmatpush2.msra.mxu0 0.0
        %906 = vmatprep.subr.mxu0 0.0
        %907 = vmatpush2.msra.mxu0 0.0
        %908 = vmatprep.subr.mxu0 0.0
        %909 = vmatpush2.msra.mxu0 0.0
        %910 = vmatprep.subr.mxu0 0.0
        %911 = vmatpush2.msra.mxu0 0.0
        %912 = vmatprep.subr.mxu0 0.0
        %913 = vmatpush2.msra.mxu0 0.0
        %914 = vmatprep.mubr.f32.mxu0 0.0
        %v915 = vand.u32 %v410, 4294901760
        %916 = vmatmul.mubr.f32.gmra.mxu0 %v915
        %v917 = vpop.f32.mrf.mxu0
        %v918 = vadd.f32 %v813, %v917
        %v919 = vpop.f32.mrf.mxu0
        %v920 = vadd.f32 %v815, %v919
        %921 = vmatprep.mubr.f32.mxu0 0.0
        %v922 = vand.u32 %v413, 4294901760
        %923 = vmatmul.mubr.f32.gmra.mxu0 %v922
        %v924 = vpop.f32.mrf.mxu0
        %v925 = vadd.f32 %v822, %v924
        %v926 = vpop.f32.mrf.mxu0
        %v927 = vadd.f32 %v824, %v926
        %928 = vmatprep.mubr.f32.mxu0 0.0
        %v929 = vand.u32 %v416, 4294901760
        %930 = vmatmul.mubr.f32.gmra.mxu0 %v929
        %v931 = vpop.f32.mrf.mxu0
        %v932 = vadd.f32 %v831, %v931
        %v933 = vpop.f32.mrf.mxu0
        %v934 = vadd.f32 %v833, %v933
        %935 = vmatprep.mubr.f32.mxu0 0.0
        %v936 = vand.u32 %v419, 4294901760
        %937 = vmatmul.mubr.f32.gmra.mxu0 %v936
        %v938 = vpop.f32.mrf.mxu0
        %v939 = vadd.f32 %v840, %v938
        %v940 = vpop.f32.mrf.mxu0
        %v941 = vadd.f32 %v842, %v940
        %942 = vdwg.mxu0
        %943 = vmatprep.subr.mxu0 0.0
        %944 = vmatpush1.msra.mxu0 0.0
        %945 = vmatprep.subr.mxu0 0.0
        %946 = vmatpush1.msra.mxu0 0.0
        %947 = vmatprep.subr.mxu0 0.0
        %948 = vmatpush1.msra.mxu0 0.0
        %949 = vmatprep.subr.mxu0 0.0
        %950 = vmatpush1.msra.mxu0 0.0
        %951 = vmatprep.subr.mxu0 0.0
        %952 = vmatpush1.msra.mxu0 0.0
        %953 = vmatprep.subr.mxu0 0.0
        %954 = vmatpush1.msra.mxu0 0.0
        %955 = vmatprep.subr.mxu0 0.0
        %956 = vmatpush1.msra.mxu0 0.0
        %957 = vmatprep.subr.mxu0 0.0
        %958 = vmatpush1.msra.mxu0 0.0
        %959 = vmatprep.subr.mxu0 0.0
        %960 = vmatpush1.msra.mxu0 0.0
        %961 = vmatprep.subr.mxu0 0.0
        %962 = vmatpush1.msra.mxu0 0.0
        %963 = vmatprep.subr.mxu0 0.0
        %964 = vmatpush1.msra.mxu0 0.0
        %965 = vmatprep.subr.mxu0 0.0
        %966 = vmatpush1.msra.mxu0 0.0
        %967 = vmatprep.subr.mxu0 0.0
        %968 = vmatpush1.msra.mxu0 0.0
        %969 = vmatprep.subr.mxu0 0.0
        %970 = vmatpush1.msra.mxu0 0.0
        %971 = vmatprep.subr.mxu0 0.0
        %972 = vmatpush1.msra.mxu0 0.0
        %v973 = vand.u32 %v424, 4294901760
        %974 = vmatprep.subr.mxu0 %v973
        %v975 = vand.u32 %v422, 4294901760
        %976 = vmatpush1.msra.mxu0 %v975
        %977 = vmatprep.subr.mxu0 0.0
        %978 = vmatpush2.msra.mxu0 0.0
        %979 = vmatprep.subr.mxu0 0.0
        %980 = vmatpush2.msra.mxu0 0.0
        %981 = vmatprep.subr.mxu0 0.0
        %982 = vmatpush2.msra.mxu0 0.0
        %983 = vmatprep.subr.mxu0 0.0
        %984 = vmatpush2.msra.mxu0 0.0
        %985 = vmatprep.subr.mxu0 0.0
        %986 = vmatpush2.msra.mxu0 0.0
        %987 = vmatprep.subr.mxu0 0.0
        %988 = vmatpush2.msra.mxu0 0.0
        %989 = vmatprep.subr.mxu0 0.0
        %990 = vmatpush2.msra.mxu0 0.0
        %991 = vmatprep.subr.mxu0 0.0
        %992 = vmatpush2.msra.mxu0 0.0
        %993 = vmatprep.subr.mxu0 0.0
        %994 = vmatpush2.msra.mxu0 0.0
        %995 = vmatprep.subr.mxu0 0.0
        %996 = vmatpush2.msra.mxu0 0.0
        %997 = vmatprep.subr.mxu0 0.0
        %998 = vmatpush2.msra.mxu0 0.0
        %999 = vmatprep.subr.mxu0 0.0
        %1000 = vmatpush2.msra.mxu0 0.0
        %1001 = vmatprep.subr.mxu0 0.0
        %1002 = vmatpush2.msra.mxu0 0.0
        %1003 = vmatprep.subr.mxu0 0.0
        %1004 = vmatpush2.msra.mxu0 0.0
        %1005 = vmatprep.subr.mxu0 0.0
        %1006 = vmatpush2.msra.mxu0 0.0
        %1007 = vmatprep.subr.mxu0 0.0
        %1008 = vmatpush2.msra.mxu0 0.0
        %1009 = vmatprep.mubr.f32.mxu0 0.0
        %v1010 = vand.u32 %v410, 4294901760
        %1011 = vmatmul.mubr.f32.gmra.mxu0 %v1010
        %v1012 = vpop.f32.mrf.mxu0
        %v1013 = vadd.f32 %v918, %v1012
        %v1014 = vpop.f32.mrf.mxu0
        %v1015 = vadd.f32 %v920, %v1014
        %1016 = vmatprep.mubr.f32.mxu0 0.0
        %v1017 = vand.u32 %v413, 4294901760
        %1018 = vmatmul.mubr.f32.gmra.mxu0 %v1017
        %v1019 = vpop.f32.mrf.mxu0
        %v1020 = vadd.f32 %v925, %v1019
        %v1021 = vpop.f32.mrf.mxu0
        %v1022 = vadd.f32 %v927, %v1021
        %1023 = vmatprep.mubr.f32.mxu0 0.0
        %v1024 = vand.u32 %v416, 4294901760
        %1025 = vmatmul.mubr.f32.gmra.mxu0 %v1024
        %v1026 = vpop.f32.mrf.mxu0
        %v1027 = vadd.f32 %v932, %v1026
        %v1028 = vpop.f32.mrf.mxu0
        %v1029 = vadd.f32 %v934, %v1028
        %1030 = vmatprep.mubr.f32.mxu0 0.0
        %v1031 = vand.u32 %v419, 4294901760
        %1032 = vmatmul.mubr.f32.gmra.mxu0 %v1031
        %v1033 = vpop.f32.mrf.mxu0
        %v1034 = vadd.f32 %v939, %v1033
        %v1035 = vpop.f32.mrf.mxu0
        %v1036 = vadd.f32 %v941, %v1035
        %1037 = vdwg.mxu0
        %v1038 = vtanh.pop %v1013
        %v1039 = vtanh.pop %v1015
        %v1040 = vtanh.pop %v1020
        %v1041 = vtanh.pop %v1022
        %v1042 = vtanh.pop %v1027
        %v1043 = vtanh.pop %v1029
        %v1044 = vtanh.pop %v1034
        %v1045 = vtanh.pop %v1036
        %1047 = vset.pattern.permute.xlu0 0
        %1048 = vperm.xlu0 %1047, %v385
        %v1049 = vpop.permute.xlu0 %1048
        %vm1051 = vcmask 261120
        %v1053 = vsel %vm1051, %v384, 0
        %1055 = vmatprep.subr.mxu0 0.0
        %1056 = vmatpush1.msra.mxu0 0.0
        %1057 = vmatprep.subr.mxu0 0.0
        %1058 = vmatpush1.msra.mxu0 0.0
        %1059 = vmatprep.subr.mxu0 0.0
        %1060 = vmatpush1.msra.mxu0 0.0
        %1061 = vmatprep.subr.mxu0 0.0
        %1062 = vmatpush1.msra.mxu0 0.0
        %1063 = vmatprep.subr.mxu0 0.0
        %1064 = vmatpush1.msra.mxu0 0.0
        %1065 = vmatprep.subr.mxu0 0.0
        %1066 = vmatpush1.msra.mxu0 0.0
        %1067 = vmatprep.subr.mxu0 0.0
        %1068 = vmatpush1.msra.mxu0 0.0
        %1069 = vmatprep.subr.mxu0 0.0
        %1070 = vmatpush1.msra.mxu0 0.0
        %1071 = vmatprep.subr.mxu0 0.0
        %1072 = vmatpush1.msra.mxu0 0.0
        %1073 = vmatprep.subr.mxu0 0.0
        %1074 = vmatpush1.msra.mxu0 0.0
        %1075 = vmatprep.subr.mxu0 0.0
        %1076 = vmatpush1.msra.mxu0 0.0
        %1077 = vmatprep.subr.mxu0 0.0
        %1078 = vmatpush1.msra.mxu0 0.0
        %v1079 = vand.u32 %v1045, 4294901760
        %1080 = vmatprep.subr.mxu0 %v1079
        %v1081 = vand.u32 %v1044, 4294901760
        %1082 = vmatpush1.msra.mxu0 %v1081
        %v1083 = vand.u32 %v1043, 4294901760
        %1084 = vmatprep.subr.mxu0 %v1083
        %v1085 = vand.u32 %v1042, 4294901760
        %1086 = vmatpush1.msra.mxu0 %v1085
        %v1087 = vand.u32 %v1041, 4294901760
        %1088 = vmatprep.subr.mxu0 %v1087
        %v1089 = vand.u32 %v1040, 4294901760
        %1090 = vmatpush1.msra.mxu0 %v1089
        %v1091 = vand.u32 %v1039, 4294901760
        %1092 = vmatprep.subr.mxu0 %v1091
        %v1093 = vand.u32 %v1038, 4294901760
        %1094 = vmatpush1.msra.mxu0 %v1093
        %1095 = vmatprep.subr.mxu0 0.0
        %1096 = vmatpush2.msra.mxu0 0.0
        %1097 = vmatprep.subr.mxu0 0.0
        %1098 = vmatpush2.msra.mxu0 0.0
        %1099 = vmatprep.subr.mxu0 0.0
        %1100 = vmatpush2.msra.mxu0 0.0
        %1101 = vmatprep.subr.mxu0 0.0
        %1102 = vmatpush2.msra.mxu0 0.0
        %1103 = vmatprep.subr.mxu0 0.0
        %1104 = vmatpush2.msra.mxu0 0.0
        %1105 = vmatprep.subr.mxu0 0.0
        %1106 = vmatpush2.msra.mxu0 0.0
        %1107 = vmatprep.subr.mxu0 0.0
        %1108 = vmatpush2.msra.mxu0 0.0
        %1109 = vmatprep.subr.mxu0 0.0
        %1110 = vmatpush2.msra.mxu0 0.0
        %1111 = vmatprep.subr.mxu0 0.0
        %1112 = vmatpush2.msra.mxu0 0.0
        %1113 = vmatprep.subr.mxu0 0.0
        %1114 = vmatpush2.msra.mxu0 0.0
        %1115 = vmatprep.subr.mxu0 0.0
        %1116 = vmatpush2.msra.mxu0 0.0
        %1117 = vmatprep.subr.mxu0 0.0
        %1118 = vmatpush2.msra.mxu0 0.0
        %1119 = vmatprep.subr.mxu0 0.0
        %1120 = vmatpush2.msra.mxu0 0.0
        %1121 = vmatprep.subr.mxu0 0.0
        %1122 = vmatpush2.msra.mxu0 0.0
        %1123 = vmatprep.subr.mxu0 0.0
        %1124 = vmatpush2.msra.mxu0 0.0
        %1125 = vmatprep.subr.mxu0 0.0
        %1126 = vmatpush2.msra.mxu0 0.0
        %1127 = vmatprep.mubr.f32.mxu0 0.0
        %v1128 = vand.u32 %v1053, 4294901760
        %v1129 = vsub.f32 %v1053, %v1128
        %v1130 = vand.u32 %v1129, 4294901760
        %v1131 = vsub.f32 %v1129, %v1130
        %v1132 = vand.u32 %v1131, 4294901760
        %1133 = vmatmul.mubr.f32.gmra.mxu0 %v1132
        %v1134 = vpop.f32.mrf.mxu0
        %v1135 = vadd.f32 %v1049, %v1134
        %v1136 = vpop.f32.mrf.mxu0
        %v1137 = vadd.f32 %v1049, %v1136
        %1138 = vdwg.mxu0
        %1139 = vmatprep.subr.mxu0 0.0
        %1140 = vmatpush1.msra.mxu0 0.0
        %1141 = vmatprep.subr.mxu0 0.0
        %1142 = vmatpush1.msra.mxu0 0.0
        %1143 = vmatprep.subr.mxu0 0.0
        %1144 = vmatpush1.msra.mxu0 0.0
        %1145 = vmatprep.subr.mxu0 0.0
        %1146 = vmatpush1.msra.mxu0 0.0
        %1147 = vmatprep.subr.mxu0 0.0
        %1148 = vmatpush1.msra.mxu0 0.0
        %1149 = vmatprep.subr.mxu0 0.0
        %1150 = vmatpush1.msra.mxu0 0.0
        %1151 = vmatprep.subr.mxu0 0.0
        %1152 = vmatpush1.msra.mxu0 0.0
        %1153 = vmatprep.subr.mxu0 0.0
        %1154 = vmatpush1.msra.mxu0 0.0
        %1155 = vmatprep.subr.mxu0 0.0
        %1156 = vmatpush1.msra.mxu0 0.0
        %1157 = vmatprep.subr.mxu0 0.0
        %1158 = vmatpush1.msra.mxu0 0.0
        %1159 = vmatprep.subr.mxu0 0.0
        %1160 = vmatpush1.msra.mxu0 0.0
        %1161 = vmatprep.subr.mxu0 0.0
        %1162 = vmatpush1.msra.mxu0 0.0
        %v1163 = vand.u32 %v1045, 4294901760
        %v1164 = vsub.f32 %v1045, %v1163
        %v1165 = vand.u32 %v1164, 4294901760
        %v1166 = vsub.f32 %v1164, %v1165
        %v1167 = vand.u32 %v1166, 4294901760
        %1168 = vmatprep.subr.mxu0 %v1167
        %v1169 = vand.u32 %v1044, 4294901760
        %v1170 = vsub.f32 %v1044, %v1169
        %v1171 = vand.u32 %v1170, 4294901760
        %v1172 = vsub.f32 %v1170, %v1171
        %v1173 = vand.u32 %v1172, 4294901760
        %1174 = vmatpush1.msra.mxu0 %v1173
        %v1175 = vand.u32 %v1043, 4294901760
        %v1176 = vsub.f32 %v1043, %v1175
        %v1177 = vand.u32 %v1176, 4294901760
        %v1178 = vsub.f32 %v1176, %v1177
        %v1179 = vand.u32 %v1178, 4294901760
        %1180 = vmatprep.subr.mxu0 %v1179
        %v1181 = vand.u32 %v1042, 4294901760
        %v1182 = vsub.f32 %v1042, %v1181
        %v1183 = vand.u32 %v1182, 4294901760
        %v1184 = vsub.f32 %v1182, %v1183
        %v1185 = vand.u32 %v1184, 4294901760
        %1186 = vmatpush1.msra.mxu0 %v1185
        %v1187 = vand.u32 %v1041, 4294901760
        %v1188 = vsub.f32 %v1041, %v1187
        %v1189 = vand.u32 %v1188, 4294901760
        %v1190 = vsub.f32 %v1188, %v1189
        %v1191 = vand.u32 %v1190, 4294901760
        %1192 = vmatprep.subr.mxu0 %v1191
        %v1193 = vand.u32 %v1040, 4294901760
        %v1194 = vsub.f32 %v1040, %v1193
        %v1195 = vand.u32 %v1194, 4294901760
        %v1196 = vsub.f32 %v1194, %v1195
        %v1197 = vand.u32 %v1196, 4294901760
        %1198 = vmatpush1.msra.mxu0 %v1197
        %v1199 = vand.u32 %v1039, 4294901760
        %v1200 = vsub.f32 %v1039, %v1199
        %v1201 = vand.u32 %v1200, 4294901760
        %v1202 = vsub.f32 %v1200, %v1201
        %v1203 = vand.u32 %v1202, 4294901760
        %1204 = vmatprep.subr.mxu0 %v1203
        %v1205 = vand.u32 %v1038, 4294901760
        %v1206 = vsub.f32 %v1038, %v1205
        %v1207 = vand.u32 %v1206, 4294901760
        %v1208 = vsub.f32 %v1206, %v1207
        %v1209 = vand.u32 %v1208, 4294901760
        %1210 = vmatpush1.msra.mxu0 %v1209
        %1211 = vmatprep.subr.mxu0 0.0
        %1212 = vmatpush2.msra.mxu0 0.0
        %1213 = vmatprep.subr.mxu0 0.0
        %1214 = vmatpush2.msra.mxu0 0.0
        %1215 = vmatprep.subr.mxu0 0.0
        %1216 = vmatpush2.msra.mxu0 0.0
        %1217 = vmatprep.subr.mxu0 0.0
        %1218 = vmatpush2.msra.mxu0 0.0
        %1219 = vmatprep.subr.mxu0 0.0
        %1220 = vmatpush2.msra.mxu0 0.0
        %1221 = vmatprep.subr.mxu0 0.0
        %1222 = vmatpush2.msra.mxu0 0.0
        %1223 = vmatprep.subr.mxu0 0.0
        %1224 = vmatpush2.msra.mxu0 0.0
        %1225 = vmatprep.subr.mxu0 0.0
        %1226 = vmatpush2.msra.mxu0 0.0
        %1227 = vmatprep.subr.mxu0 0.0
        %1228 = vmatpush2.msra.mxu0 0.0
        %1229 = vmatprep.subr.mxu0 0.0
        %1230 = vmatpush2.msra.mxu0 0.0
        %1231 = vmatprep.subr.mxu0 0.0
        %1232 = vmatpush2.msra.mxu0 0.0
        %1233 = vmatprep.subr.mxu0 0.0
        %1234 = vmatpush2.msra.mxu0 0.0
        %1235 = vmatprep.subr.mxu0 0.0
        %1236 = vmatpush2.msra.mxu0 0.0
        %1237 = vmatprep.subr.mxu0 0.0
        %1238 = vmatpush2.msra.mxu0 0.0
        %1239 = vmatprep.subr.mxu0 0.0
        %1240 = vmatpush2.msra.mxu0 0.0
        %1241 = vmatprep.subr.mxu0 0.0
        %1242 = vmatpush2.msra.mxu0 0.0
        %1243 = vmatprep.mubr.f32.mxu0 0.0
        %v1244 = vand.u32 %v1053, 4294901760
        %1245 = vmatmul.mubr.f32.gmra.mxu0 %v1244
        %v1246 = vpop.f32.mrf.mxu0
        %v1247 = vadd.f32 %v1135, %v1246
        %v1248 = vpop.f32.mrf.mxu0
        %v1249 = vadd.f32 %v1137, %v1248
        %1250 = vdwg.mxu0
        %1251 = vmatprep.subr.mxu0 0.0
        %1252 = vmatpush1.msra.mxu0 0.0
        %1253 = vmatprep.subr.mxu0 0.0
        %1254 = vmatpush1.msra.mxu0 0.0
        %1255 = vmatprep.subr.mxu0 0.0
        %1256 = vmatpush1.msra.mxu0 0.0
        %1257 = vmatprep.subr.mxu0 0.0
        %1258 = vmatpush1.msra.mxu0 0.0
        %1259 = vmatprep.subr.mxu0 0.0
        %1260 = vmatpush1.msra.mxu0 0.0
        %1261 = vmatprep.subr.mxu0 0.0
        %1262 = vmatpush1.msra.mxu0 0.0
        %1263 = vmatprep.subr.mxu0 0.0
        %1264 = vmatpush1.msra.mxu0 0.0
        %1265 = vmatprep.subr.mxu0 0.0
        %1266 = vmatpush1.msra.mxu0 0.0
        %1267 = vmatprep.subr.mxu0 0.0
        %1268 = vmatpush1.msra.mxu0 0.0
        %1269 = vmatprep.subr.mxu0 0.0
        %1270 = vmatpush1.msra.mxu0 0.0
        %1271 = vmatprep.subr.mxu0 0.0
        %1272 = vmatpush1.msra.mxu0 0.0
        %1273 = vmatprep.subr.mxu0 0.0
        %1274 = vmatpush1.msra.mxu0 0.0
        %v1275 = vand.u32 %v1045, 4294901760
        %v1276 = vsub.f32 %v1045, %v1275
        %1277 = vmatprep.subr.mxu0 %v1276
        %v1278 = vand.u32 %v1044, 4294901760
        %v1279 = vsub.f32 %v1044, %v1278
        %1280 = vmatpush1.msra.mxu0 %v1279
        %v1281 = vand.u32 %v1043, 4294901760
        %v1282 = vsub.f32 %v1043, %v1281
        %1283 = vmatprep.subr.mxu0 %v1282
        %v1284 = vand.u32 %v1042, 4294901760
        %v1285 = vsub.f32 %v1042, %v1284
        %1286 = vmatpush1.msra.mxu0 %v1285
        %v1287 = vand.u32 %v1041, 4294901760
        %v1288 = vsub.f32 %v1041, %v1287
        %1289 = vmatprep.subr.mxu0 %v1288
        %v1290 = vand.u32 %v1040, 4294901760
        %v1291 = vsub.f32 %v1040, %v1290
        %1292 = vmatpush1.msra.mxu0 %v1291
        %v1293 = vand.u32 %v1039, 4294901760
        %v1294 = vsub.f32 %v1039, %v1293
        %1295 = vmatprep.subr.mxu0 %v1294
        %v1296 = vand.u32 %v1038, 4294901760
        %v1297 = vsub.f32 %v1038, %v1296
        %1298 = vmatpush1.msra.mxu0 %v1297
        %1299 = vmatprep.subr.mxu0 0.0
        %1300 = vmatpush2.msra.mxu0 0.0
        %1301 = vmatprep.subr.mxu0 0.0
        %1302 = vmatpush2.msra.mxu0 0.0
        %1303 = vmatprep.subr.mxu0 0.0
        %1304 = vmatpush2.msra.mxu0 0.0
        %1305 = vmatprep.subr.mxu0 0.0
        %1306 = vmatpush2.msra.mxu0 0.0
        %1307 = vmatprep.subr.mxu0 0.0
        %1308 = vmatpush2.msra.mxu0 0.0
        %1309 = vmatprep.subr.mxu0 0.0
        %1310 = vmatpush2.msra.mxu0 0.0
        %1311 = vmatprep.subr.mxu0 0.0
        %1312 = vmatpush2.msra.mxu0 0.0
        %1313 = vmatprep.subr.mxu0 0.0
        %1314 = vmatpush2.msra.mxu0 0.0
        %1315 = vmatprep.subr.mxu0 0.0
        %1316 = vmatpush2.msra.mxu0 0.0
        %1317 = vmatprep.subr.mxu0 0.0
        %1318 = vmatpush2.msra.mxu0 0.0
        %1319 = vmatprep.subr.mxu0 0.0
        %1320 = vmatpush2.msra.mxu0 0.0
        %1321 = vmatprep.subr.mxu0 0.0
        %1322 = vmatpush2.msra.mxu0 0.0
        %1323 = vmatprep.subr.mxu0 0.0
        %1324 = vmatpush2.msra.mxu0 0.0
        %1325 = vmatprep.subr.mxu0 0.0
        %1326 = vmatpush2.msra.mxu0 0.0
        %1327 = vmatprep.subr.mxu0 0.0
        %1328 = vmatpush2.msra.mxu0 0.0
        %1329 = vmatprep.subr.mxu0 0.0
        %1330 = vmatpush2.msra.mxu0 0.0
        %1331 = vmatprep.mubr.f32.mxu0 0.0
        %v1332 = vand.u32 %v1053, 4294901760
        %v1333 = vsub.f32 %v1053, %v1332
        %1334 = vmatmul.mubr.f32.gmra.mxu0 %v1333
        %v1335 = vpop.f32.mrf.mxu0
        %v1336 = vadd.f32 %v1247, %v1335
        %v1337 = vpop.f32.mrf.mxu0
        %v1338 = vadd.f32 %v1249, %v1337
        %1339 = vdwg.mxu0
        %1340 = vmatprep.subr.mxu0 0.0
        %1341 = vmatpush1.msra.mxu0 0.0
        %1342 = vmatprep.subr.mxu0 0.0
        %1343 = vmatpush1.msra.mxu0 0.0
        %1344 = vmatprep.subr.mxu0 0.0
        %1345 = vmatpush1.msra.mxu0 0.0
        %1346 = vmatprep.subr.mxu0 0.0
        %1347 = vmatpush1.msra.mxu0 0.0
        %1348 = vmatprep.subr.mxu0 0.0
        %1349 = vmatpush1.msra.mxu0 0.0
        %1350 = vmatprep.subr.mxu0 0.0
        %1351 = vmatpush1.msra.mxu0 0.0
        %1352 = vmatprep.subr.mxu0 0.0
        %1353 = vmatpush1.msra.mxu0 0.0
        %1354 = vmatprep.subr.mxu0 0.0
        %1355 = vmatpush1.msra.mxu0 0.0
        %1356 = vmatprep.subr.mxu0 0.0
        %1357 = vmatpush1.msra.mxu0 0.0
        %1358 = vmatprep.subr.mxu0 0.0
        %1359 = vmatpush1.msra.mxu0 0.0
        %1360 = vmatprep.subr.mxu0 0.0
        %1361 = vmatpush1.msra.mxu0 0.0
        %1362 = vmatprep.subr.mxu0 0.0
        %1363 = vmatpush1.msra.mxu0 0.0
        %v1364 = vand.u32 %v1045, 4294901760
        %1365 = vmatprep.subr.mxu0 %v1364
        %v1366 = vand.u32 %v1044, 4294901760
        %1367 = vmatpush1.msra.mxu0 %v1366
        %v1368 = vand.u32 %v1043, 4294901760
        %1369 = vmatprep.subr.mxu0 %v1368
        %v1370 = vand.u32 %v1042, 4294901760
        %1371 = vmatpush1.msra.mxu0 %v1370
        %v1372 = vand.u32 %v1041, 4294901760
        %1373 = vmatprep.subr.mxu0 %v1372
        %v1374 = vand.u32 %v1040, 4294901760
        %1375 = vmatpush1.msra.mxu0 %v1374
        %v1376 = vand.u32 %v1039, 4294901760
        %1377 = vmatprep.subr.mxu0 %v1376
        %v1378 = vand.u32 %v1038, 4294901760
        %1379 = vmatpush1.msra.mxu0 %v1378
        %1380 = vmatprep.subr.mxu0 0.0
        %1381 = vmatpush2.msra.mxu0 0.0
        %1382 = vmatprep.subr.mxu0 0.0
        %1383 = vmatpush2.msra.mxu0 0.0
        %1384 = vmatprep.subr.mxu0 0.0
        %1385 = vmatpush2.msra.mxu0 0.0
        %1386 = vmatprep.subr.mxu0 0.0
        %1387 = vmatpush2.msra.mxu0 0.0
        %1388 = vmatprep.subr.mxu0 0.0
        %1389 = vmatpush2.msra.mxu0 0.0
        %1390 = vmatprep.subr.mxu0 0.0
        %1391 = vmatpush2.msra.mxu0 0.0
        %1392 = vmatprep.subr.mxu0 0.0
        %1393 = vmatpush2.msra.mxu0 0.0
        %1394 = vmatprep.subr.mxu0 0.0
        %1395 = vmatpush2.msra.mxu0 0.0
        %1396 = vmatprep.subr.mxu0 0.0
        %1397 = vmatpush2.msra.mxu0 0.0
        %1398 = vmatprep.subr.mxu0 0.0
        %1399 = vmatpush2.msra.mxu0 0.0
        %1400 = vmatprep.subr.mxu0 0.0
        %1401 = vmatpush2.msra.mxu0 0.0
        %1402 = vmatprep.subr.mxu0 0.0
        %1403 = vmatpush2.msra.mxu0 0.0
        %1404 = vmatprep.subr.mxu0 0.0
        %1405 = vmatpush2.msra.mxu0 0.0
        %1406 = vmatprep.subr.mxu0 0.0
        %1407 = vmatpush2.msra.mxu0 0.0
        %1408 = vmatprep.subr.mxu0 0.0
        %1409 = vmatpush2.msra.mxu0 0.0
        %1410 = vmatprep.subr.mxu0 0.0
        %1411 = vmatpush2.msra.mxu0 0.0
        %1412 = vmatprep.mubr.f32.mxu0 0.0
        %v1413 = vand.u32 %v1053, 4294901760
        %v1414 = vsub.f32 %v1053, %v1413
        %v1415 = vand.u32 %v1414, 4294901760
        %1416 = vmatmul.mubr.f32.gmra.mxu0 %v1415
        %v1417 = vpop.f32.mrf.mxu0
        %v1418 = vadd.f32 %v1336, %v1417
        %v1419 = vpop.f32.mrf.mxu0
        %v1420 = vadd.f32 %v1338, %v1419
        %1421 = vdwg.mxu0
        %1422 = vmatprep.subr.mxu0 0.0
        %1423 = vmatpush1.msra.mxu0 0.0
        %1424 = vmatprep.subr.mxu0 0.0
        %1425 = vmatpush1.msra.mxu0 0.0
        %1426 = vmatprep.subr.mxu0 0.0
        %1427 = vmatpush1.msra.mxu0 0.0
        %1428 = vmatprep.subr.mxu0 0.0
        %1429 = vmatpush1.msra.mxu0 0.0
        %1430 = vmatprep.subr.mxu0 0.0
        %1431 = vmatpush1.msra.mxu0 0.0
        %1432 = vmatprep.subr.mxu0 0.0
        %1433 = vmatpush1.msra.mxu0 0.0
        %1434 = vmatprep.subr.mxu0 0.0
        %1435 = vmatpush1.msra.mxu0 0.0
        %1436 = vmatprep.subr.mxu0 0.0
        %1437 = vmatpush1.msra.mxu0 0.0
        %1438 = vmatprep.subr.mxu0 0.0
        %1439 = vmatpush1.msra.mxu0 0.0
        %1440 = vmatprep.subr.mxu0 0.0
        %1441 = vmatpush1.msra.mxu0 0.0
        %1442 = vmatprep.subr.mxu0 0.0
        %1443 = vmatpush1.msra.mxu0 0.0
        %1444 = vmatprep.subr.mxu0 0.0
        %1445 = vmatpush1.msra.mxu0 0.0
        %v1446 = vand.u32 %v1045, 4294901760
        %v1447 = vsub.f32 %v1045, %v1446
        %v1448 = vand.u32 %v1447, 4294901760
        %1449 = vmatprep.subr.mxu0 %v1448
        %v1450 = vand.u32 %v1044, 4294901760
        %v1451 = vsub.f32 %v1044, %v1450
        %v1452 = vand.u32 %v1451, 4294901760
        %1453 = vmatpush1.msra.mxu0 %v1452
        %v1454 = vand.u32 %v1043, 4294901760
        %v1455 = vsub.f32 %v1043, %v1454
        %v1456 = vand.u32 %v1455, 4294901760
        %1457 = vmatprep.subr.mxu0 %v1456
        %v1458 = vand.u32 %v1042, 4294901760
        %v1459 = vsub.f32 %v1042, %v1458
        %v1460 = vand.u32 %v1459, 4294901760
        %1461 = vmatpush1.msra.mxu0 %v1460
        %v1462 = vand.u32 %v1041, 4294901760
        %v1463 = vsub.f32 %v1041, %v1462
        %v1464 = vand.u32 %v1463, 4294901760
        %1465 = vmatprep.subr.mxu0 %v1464
        %v1466 = vand.u32 %v1040, 4294901760
        %v1467 = vsub.f32 %v1040, %v1466
        %v1468 = vand.u32 %v1467, 4294901760
        %1469 = vmatpush1.msra.mxu0 %v1468
        %v1470 = vand.u32 %v1039, 4294901760
        %v1471 = vsub.f32 %v1039, %v1470
        %v1472 = vand.u32 %v1471, 4294901760
        %1473 = vmatprep.subr.mxu0 %v1472
        %v1474 = vand.u32 %v1038, 4294901760
        %v1475 = vsub.f32 %v1038, %v1474
        %v1476 = vand.u32 %v1475, 4294901760
        %1477 = vmatpush1.msra.mxu0 %v1476
        %1478 = vmatprep.subr.mxu0 0.0
        %1479 = vmatpush2.msra.mxu0 0.0
        %1480 = vmatprep.subr.mxu0 0.0
        %1481 = vmatpush2.msra.mxu0 0.0
        %1482 = vmatprep.subr.mxu0 0.0
        %1483 = vmatpush2.msra.mxu0 0.0
        %1484 = vmatprep.subr.mxu0 0.0
        %1485 = vmatpush2.msra.mxu0 0.0
        %1486 = vmatprep.subr.mxu0 0.0
        %1487 = vmatpush2.msra.mxu0 0.0
        %1488 = vmatprep.subr.mxu0 0.0
        %1489 = vmatpush2.msra.mxu0 0.0
        %1490 = vmatprep.subr.mxu0 0.0
        %1491 = vmatpush2.msra.mxu0 0.0
        %1492 = vmatprep.subr.mxu0 0.0
        %1493 = vmatpush2.msra.mxu0 0.0
        %1494 = vmatprep.subr.mxu0 0.0
        %1495 = vmatpush2.msra.mxu0 0.0
        %1496 = vmatprep.subr.mxu0 0.0
        %1497 = vmatpush2.msra.mxu0 0.0
        %1498 = vmatprep.subr.mxu0 0.0
        %1499 = vmatpush2.msra.mxu0 0.0
        %1500 = vmatprep.subr.mxu0 0.0
        %1501 = vmatpush2.msra.mxu0 0.0
        %1502 = vmatprep.subr.mxu0 0.0
        %1503 = vmatpush2.msra.mxu0 0.0
        %1504 = vmatprep.subr.mxu0 0.0
        %1505 = vmatpush2.msra.mxu0 0.0
        %1506 = vmatprep.subr.mxu0 0.0
        %1507 = vmatpush2.msra.mxu0 0.0
        %1508 = vmatprep.subr.mxu0 0.0
        %1509 = vmatpush2.msra.mxu0 0.0
        %1510 = vmatprep.mubr.f32.mxu0 0.0
        %v1511 = vand.u32 %v1053, 4294901760
        %1512 = vmatmul.mubr.f32.gmra.mxu0 %v1511
        %v1513 = vpop.f32.mrf.mxu0
        %v1514 = vadd.f32 %v1418, %v1513
        %v1515 = vpop.f32.mrf.mxu0
        %v1516 = vadd.f32 %v1420, %v1515
        %1517 = vdwg.mxu0
        %1518 = vmatprep.subr.mxu0 0.0
        %1519 = vmatpush1.msra.mxu0 0.0
        %1520 = vmatprep.subr.mxu0 0.0
        %1521 = vmatpush1.msra.mxu0 0.0
        %1522 = vmatprep.subr.mxu0 0.0
        %1523 = vmatpush1.msra.mxu0 0.0
        %1524 = vmatprep.subr.mxu0 0.0
        %1525 = vmatpush1.msra.mxu0 0.0
        %1526 = vmatprep.subr.mxu0 0.0
        %1527 = vmatpush1.msra.mxu0 0.0
        %1528 = vmatprep.subr.mxu0 0.0
        %1529 = vmatpush1.msra.mxu0 0.0
        %1530 = vmatprep.subr.mxu0 0.0
        %1531 = vmatpush1.msra.mxu0 0.0
        %1532 = vmatprep.subr.mxu0 0.0
        %1533 = vmatpush1.msra.mxu0 0.0
        %1534 = vmatprep.subr.mxu0 0.0
        %1535 = vmatpush1.msra.mxu0 0.0
        %1536 = vmatprep.subr.mxu0 0.0
        %1537 = vmatpush1.msra.mxu0 0.0
        %1538 = vmatprep.subr.mxu0 0.0
        %1539 = vmatpush1.msra.mxu0 0.0
        %1540 = vmatprep.subr.mxu0 0.0
        %1541 = vmatpush1.msra.mxu0 0.0
        %v1542 = vand.u32 %v1045, 4294901760
        %1543 = vmatprep.subr.mxu0 %v1542
        %v1544 = vand.u32 %v1044, 4294901760
        %1545 = vmatpush1.msra.mxu0 %v1544
        %v1546 = vand.u32 %v1043, 4294901760
        %1547 = vmatprep.subr.mxu0 %v1546
        %v1548 = vand.u32 %v1042, 4294901760
        %1549 = vmatpush1.msra.mxu0 %v1548
        %v1550 = vand.u32 %v1041, 4294901760
        %1551 = vmatprep.subr.mxu0 %v1550
        %v1552 = vand.u32 %v1040, 4294901760
        %1553 = vmatpush1.msra.mxu0 %v1552
        %v1554 = vand.u32 %v1039, 4294901760
        %1555 = vmatprep.subr.mxu0 %v1554
        %v1556 = vand.u32 %v1038, 4294901760
        %1557 = vmatpush1.msra.mxu0 %v1556
        %1558 = vmatprep.subr.mxu0 0.0
        %1559 = vmatpush2.msra.mxu0 0.0
        %1560 = vmatprep.subr.mxu0 0.0
        %1561 = vmatpush2.msra.mxu0 0.0
        %1562 = vmatprep.subr.mxu0 0.0
        %1563 = vmatpush2.msra.mxu0 0.0
        %1564 = vmatprep.subr.mxu0 0.0
        %1565 = vmatpush2.msra.mxu0 0.0
        %1566 = vmatprep.subr.mxu0 0.0
        %1567 = vmatpush2.msra.mxu0 0.0
        %1568 = vmatprep.subr.mxu0 0.0
        %1569 = vmatpush2.msra.mxu0 0.0
        %1570 = vmatprep.subr.mxu0 0.0
        %1571 = vmatpush2.msra.mxu0 0.0
        %1572 = vmatprep.subr.mxu0 0.0
        %1573 = vmatpush2.msra.mxu0 0.0
        %1574 = vmatprep.subr.mxu0 0.0
        %1575 = vmatpush2.msra.mxu0 0.0
        %1576 = vmatprep.subr.mxu0 0.0
        %1577 = vmatpush2.msra.mxu0 0.0
        %1578 = vmatprep.subr.mxu0 0.0
        %1579 = vmatpush2.msra.mxu0 0.0
        %1580 = vmatprep.subr.mxu0 0.0
        %1581 = vmatpush2.msra.mxu0 0.0
        %1582 = vmatprep.subr.mxu0 0.0
        %1583 = vmatpush2.msra.mxu0 0.0
        %1584 = vmatprep.subr.mxu0 0.0
        %1585 = vmatpush2.msra.mxu0 0.0
        %1586 = vmatprep.subr.mxu0 0.0
        %1587 = vmatpush2.msra.mxu0 0.0
        %1588 = vmatprep.subr.mxu0 0.0
        %1589 = vmatpush2.msra.mxu0 0.0
        %1590 = vmatprep.mubr.f32.mxu0 0.0
        %v1591 = vand.u32 %v1053, 4294901760
        %1592 = vmatmul.mubr.f32.gmra.mxu0 %v1591
        %v1593 = vpop.f32.mrf.mxu0
        %v1594 = vadd.f32 %v1514, %v1593
        %v1595 = vpop.f32.mrf.mxu0
        %v1596 = vadd.f32 %v1516, %v1595
        %1597 = vdwg.mxu0
        %v1599 = vsub.f32 %v1594, %v373
        %v1600 = vsub.f32 %v1596, %v407
        %v1601 = vsub.f32 %v373, %v374
        %v1602 = vmul.f32 %v375, %v1601
        %v1604 = vcombine.high %v1602, %v1602
        %v1606 = vadd.f32 %v1599, %v1602
        %v1607 = vadd.f32 %v1600, %v1604
        %v1608 = vmul.f32 %v1606, %v1606
        %v1609 = vmul.f32 %v1607, %v1607
        %s1610 = sld [smem:[#allocation2]]
        %v1611 = vsel %vm421, %v1608, 0.0
        %v1612 = vsel %vm421, %v1609, 0.0
        %v1613 = vadd.f32 %v1611, %v1612
        %1614 = vadd.xlane.f32.xlu0 %v1613
        %v1615 = vpop.xlane.xlu0 %1614
        %v1616 = vrot.slane %v1615, 4
        %v1617 = vadd.f32 %v1615, %v1616
        %v1618 = vrot.slane %v1617, 2
        %v1619 = vadd.f32 %v1617, %v1618
        %v1620 = vrot.slane %v1619, 1
        %v1621 = vadd.f32 %v1619, %v1620
        %s1622 = vtos %v1621
        %s1623 = sadd.f32 %s1610, %s1622
        %s1624 = scalar_lea.smem [#allocation2], 0
        %1625 = sst [smem:[%s1624]] %s1623
        %p1626 = scmp.eq.s32.totalorder %s23, 1
        %p1627 = pnand %p1626, %p366
        %p1628 = pneg %p1627
        // Predicated region
        $region53: #{tpu_custom_call.1} parent=47 // pred_check
          _
        $region54: #{tpu_custom_call.1} parent=47 // pred_check_branch
          %1630 = sbr.rel (%p1627) target = $region56
        $region55: #{tpu_custom_call.1} parent=47 // pred_region
          %s1631 = sld [smem:[#allocation2]]
          %s1632 = smul.f32 %s1631, 0.00048828125
          %v1633 = vstv %s1632
          %v1634 = vrsqrt.pop %v1633
          %v1635 = vmul.f32 %v1633, %v1634
          %vm1636 = vcmp.eq.f32.partialorder %v1633, inf
          %v1637 = vsel %vm1636, %v1633, %v1635
          %vm1638 = vcmp.eq.f32.partialorder %v1633, 0.0
          %v1639 = vand.u32 %v1633, 2147483648
          %v1640 = vsel %vm1638, %v1639, %v1637
          %s1641 = vtos %v1640
          %s1642 = scalar_lea.smem [#allocation3], 0
          %1643 = sst [smem:[%s1642]] %s1641
        $region56: #{tpu_custom_call.1} parent=47 // pred_fallthru
          _
        // Predicated region
        $region57: #{tpu_custom_call.1} parent=47 // pred_check
          %p1644 = pneg %p212
        $region58: #{tpu_custom_call.1} parent=47 // pred_check_branch
          %1646 = sbr.rel (%p1644) target = $region60
        $region59: #{tpu_custom_call.1} parent=47 // pred_region
          %s1648 = ssub.s32 16, 16
          %1649 = vsyncadd [#allocation4], %s1648
          %1652 = dma.smem_to_hbm [#allocation3], 16, %s7, [#allocation4]
        $region60: #{tpu_custom_call.1} parent=47 // pred_fallthru
          _
        // Predicated region
        $region61: #{tpu_custom_call.1} parent=47 // pred_check
          %p1653 = pneg %p212
        $region62: #{tpu_custom_call.1} parent=47 // pred_check_branch
          %1655 = sbr.rel (%p1653) target = $region64
        $region63: #{tpu_custom_call.1} parent=47 // pred_region
          %1656 = dma.done [#allocation4], 16
        $region64: #{tpu_custom_call.1} parent=47 // pred_fallthru
          _
        %1657 = sfence
      $region48: #{tpu_custom_call.1} parent=5 // pred_fallthru
        _
      %p1658 = scmp.le.s32.totalorder 2, %s14
      // Predicated region
      $region65: #{tpu_custom_call.1} parent=5 // pred_check
        %p1659 = pneg %p1658
      $region66: #{tpu_custom_call.1} parent=5 // pred_check_branch
        %1661 = sbr.rel (%p1659) target = $region68
      $region67: #{tpu_custom_call.1} parent=5 // pred_region
        %s1662 = ssub.s32 %s14, 2
      $region68: #{tpu_custom_call.1} parent=5 // pred_fallthru
        _
    $region6: #{tpu_custom_call.1} parent=1 // loop_footer
      %s18 = sadd.s32 1, %s14
    $region7: #{tpu_custom_call.1} parent=1 // loop_footer_branch
      %13 = sbr.rel target = $region3
    $region8: #{tpu_custom_call.1} parent=1 // loop_exit
      _
    %1663 = vsyncpa [#allocation4], 1
    %s1664 = scalar_lea.sflag [#allocation4], 1
    %1665 = vsyncpa %s1664, 1

</llo_original>
